<compile_context>
chip_gen: v7x
topology: tpu7x:2x2x1
jax: 0.10.0
libtpu: 0.0.40
codegen_flags: <defaults>
</compile_context>

<pallas_src>
import functools

import jax
import jax.numpy as jnp
import numpy as np
from jax.experimental import pallas as pl
from jax.experimental.pallas import tpu as pltpu

# true layer widths of the PyTorch module
DIMS = [28 * 28, 128, 64, 12, 3, 12, 64, 128, 28 * 28]
D_IN = DIMS[0]    # 784
D_OUT = DIMS[-1]  # 784
HID = 128         # padded interior width (all hidden dims <= 128)

DEFAULT_BATCH_TILE = 1024  # large tile to amortize per-grid-step overhead


def _round_up(n, m):
    return ((n + m - 1) // m) * m


def pick_batch_tile(B, default_tile=DEFAULT_BATCH_TILE, min_split=256):
    """Static batch-tile choice.

    * tiny batches: clamp to round_up(B, 16) so we don't burn MXU passes on
      zero rows (16 = bf16 sublane packing).
    * larger batches: keep at least 2 grid steps (v7x megacore shards the
      "parallel" grid axis across its 2 TensorCores), capped at default_tile.
    """
    if B <= min_split:
        return min(default_tile, _round_up(max(B, 1), 16))
    return min(default_tile, _round_up(-(-B // 2), 16))


def autoencoder_kernel(x_ref, w1_ref, wmid_ref, w8_ref, bmid_ref, b8_ref, o_ref):
    """Whole forward pass for one batch tile, entirely in VMEM.

    Weights are bf16, biases f32; every matmul uses bf16 operands with f32
    accumulation (preferred_element_type), bias-add / ReLU / Tanh in f32.
    """
    f32 = jnp.float32
    bf16 = jnp.bfloat16

    # layer 1: 784 -> 128, ReLU
    h = jnp.dot(x_ref[...].astype(bf16), w1_ref[...],
                preferred_element_type=f32) + bmid_ref[0:1, :]
    h = jnp.maximum(h, 0.0)

    # interior layers (2, 3, fused 4+5, 6, 7): padded 128 -> 128, ReLU
    for i in range(5):
        h = jnp.dot(h.astype(bf16), wmid_ref[i],
                    preferred_element_type=f32) + bmid_ref[i + 1:i + 2, :]
        h = jnp.maximum(h, 0.0)

    # layer 8: 128 -> 784, Tanh
    h = jnp.dot(h.astype(bf16), w8_ref[...],
                preferred_element_type=f32) + b8_ref[...]
    o_ref[...] = jnp.tanh(h).astype(o_ref.dtype)


def pack_params(params):
    """One-time weight packing (call OUTSIDE the per-step forward).

    Fuses the activation-free bottleneck pair (12->3 then 3->12) into one
    exact 12->12 linear, zero-pads interior dims to 128, stacks interior
    weights/biases into single operands, and casts weights to bf16.
    """
    p = [(jnp.asarray(w, jnp.float32), jnp.asarray(b, jnp.float32))
         for (w, b) in params]
    (w1, b1), (w2, b2), (w3, b3), (w4, b4), \
        (w5, b5), (w6, b6), (w7, b7), (w8, b8) = p

    # layers 4 (12->3, no activation) and 5 (3->12) collapse exactly (f32):
    w45 = w4 @ w5          # (12, 12)
    b45 = b4 @ w5 + b5     # (12,)

    def padw(w):
        din, dout = w.shape
        return jnp.zeros((HID, HID), jnp.float32).at[:din, :dout].set(w)

    def padb(b):
        return jnp.zeros((HID,), jnp.float32).at[:b.shape[0]].set(b)

    wmid = jnp.stack([padw(w2), padw(w3), padw(w45),
                      padw(w6), padw(w7)]).astype(jnp.bfloat16)   # (5,128,128)
    bmid = jnp.stack([padb(b1), padb(b2), padb(b3),
                      padb(b45), padb(b6), padb(b7)])             # (6,128) f32
    w1p = w1.astype(jnp.bfloat16)                                 # (784,128)
    w8p = w8.astype(jnp.bfloat16)                                 # (128,784)
    b8p = b8.reshape(1, D_OUT)                                    # (1,784) f32
    return w1p, wmid, w8p, bmid, b8p


@functools.partial(jax.jit, static_argnames=("batch_tile",))
def autoencoder_forward_packed(x, packed, batch_tile=DEFAULT_BATCH_TILE):
    """x: (B, 784) float32; packed: output of pack_params()."""
    w1, wmid, w8, bmid, b8 = packed
    B = x.shape[0]
    Bp = _round_up(B, batch_tile)
    x = x.astype(jnp.float32)
    if Bp != B:
        x = jnp.pad(x, ((0, Bp - B), (0, 0)))   # zero rows: harmless, sliced off

    out = pl.pallas_call(
        autoencoder_kernel,
        out_shape=jax.ShapeDtypeStruct((Bp, D_OUT), jnp.float32),
        grid_spec=pltpu.PrefetchScalarGridSpec(
            num_scalar_prefetch=0,
            grid=(Bp // batch_tile,),
            in_specs=[
                pl.BlockSpec((batch_tile, D_IN), lambda i: (i, 0)),   # x tile
                pl.BlockSpec((D_IN, HID), lambda i: (0, 0)),          # W1 (bf16)
                pl.BlockSpec((5, HID, HID), lambda i: (0, 0, 0)),     # W2..W7 (bf16)
                pl.BlockSpec((HID, D_OUT), lambda i: (0, 0)),         # W8 (bf16)
                pl.BlockSpec((6, HID), lambda i: (0, 0)),             # b1..b7 (f32)
                pl.BlockSpec((1, D_OUT), lambda i: (0, 0)),           # b8 (f32)
            ],
            out_specs=pl.BlockSpec((batch_tile, D_OUT), lambda i: (i, 0)),
        ),
        compiler_params=pltpu.CompilerParams(
            dimension_semantics=("parallel",),
            vmem_limit_bytes=48 << 20),
    )(x, w1, wmid, w8, bmid, b8)

    return out[:B]


def autoencoder_forward(x, packed):
    """Convenience wrapper: picks a static batch tile, then calls the jitted path."""
    return autoencoder_forward_packed(
        x, packed, batch_tile=pick_batch_tile(x.shape[0]))


def init_params(key):
    """PyTorch-default-style uniform init, deterministic via PRNGKey."""
    params = []
    for li in range(8):
        din, dout = DIMS[li], DIMS[li + 1]
        key, kw, kb = jax.random.split(key, 3)
        bound = 1.0 / np.sqrt(din)
        w = jax.random.uniform(kw, (din, dout), jnp.float32, -bound, bound)
        b = jax.random.uniform(kb, (dout,), jnp.float32, -bound, bound)
        params.append((w, b))
    return params


def reference_forward(x, params):
    """Faithful (unfused, f32) PyTorch-style reference."""
    h = x
    for li, (w, b) in enumerate(params):
        h = h @ w + b
        if li in (0, 1, 2, 4, 5, 6):
            h = jnp.maximum(h, 0.0)
        elif li == 7:
            h = jnp.tanh(h)
    return h


if __name__ == "__main__":
    key = jax.random.PRNGKey(0)
    key, kx = jax.random.split(key)

    params = init_params(key)
    packed = pack_params(params)          # one-time packing, off the hot path

    batch = 8
    x = jax.random.uniform(kx, (batch, 28 * 28), jnp.float32, -1.0, 1.0)

    out = autoencoder_forward(x, packed)
    out = jax.block_until_ready(out)

    ref = reference_forward(x, params)
    assert out.shape == (batch, 28 * 28)
    # bf16 matmuls with f32 accumulation vs. the pure-f32 reference:
    assert jnp.allclose(out, ref, atol=3e-2, rtol=3e-2), "mismatch vs. reference"

    print("KERNEL_OK")
</pallas_src>

<mosaic_0001>
module attributes {stable_mosaic.version = 11 : i64} {
  func.func @autoencoder_kernel(%arg0: i32, %arg1: memref<16x784xf32, #tpu.memory_space<vmem>>, %arg2: memref<784x128xbf16, #tpu.memory_space<vmem>>, %arg3: memref<5x128x128xbf16, #tpu.memory_space<vmem>>, %arg4: memref<128x784xbf16, #tpu.memory_space<vmem>>, %arg5: memref<6x128xf32, #tpu.memory_space<vmem>>, %arg6: memref<1x784xf32, #tpu.memory_space<vmem>>, %arg7: memref<16x784xf32, #tpu.memory_space<vmem>>) attributes {dimension_semantics = [#tpu.dimension_semantics<parallel>], iteration_bounds = array<i64: 1>, scalar_prefetch = 0 : i64, scratch_operands = 0 : i64, tpu.core_type = #tpu.core_type<tc>, window_params = [{transform_indices = @transform_0, window_bounds = array<i64: 16, 784>}, {pipeline_mode = #tpu.pipeline_mode<synchronous>, transform_indices = @transform_1, window_bounds = array<i64: 784, 128>}, {pipeline_mode = #tpu.pipeline_mode<synchronous>, transform_indices = @transform_2, window_bounds = array<i64: 5, 128, 128>}, {pipeline_mode = #tpu.pipeline_mode<synchronous>, transform_indices = @transform_3, window_bounds = array<i64: 128, 784>}, {pipeline_mode = #tpu.pipeline_mode<synchronous>, transform_indices = @transform_4, window_bounds = array<i64: 6, 128>}, {pipeline_mode = #tpu.pipeline_mode<synchronous>, transform_indices = @transform_5, window_bounds = array<i64: 1, 784>}, {transform_indices = @transform_6, window_bounds = array<i64: 16, 784>}]} {
    %c0 = arith.constant 0 : index
    %c0_0 = arith.constant 0 : index
    %0 = vector.load %arg1[%c0, %c0_0] : memref<16x784xf32, #tpu.memory_space<vmem>>, vector<16x784xf32>
    %1 = arith.truncf %0 : vector<16x784xf32> to vector<16x784xbf16>
    %c0_1 = arith.constant 0 : index
    %c0_2 = arith.constant 0 : index
    %2 = vector.load %arg2[%c0_1, %c0_2] : memref<784x128xbf16, #tpu.memory_space<vmem>>, vector<784x128xbf16>
    %cst = arith.constant dense<0.000000e+00> : vector<16x128xf32>
    %3 = tpu.matmul %1, %2, %cst {dimension_numbers = #tpu.dot_dimension_numbers<[1], [0], [0], [1], [0, 0, 1, 1], [], []>} : vector<16x784xbf16>, vector<784x128xbf16>, vector<16x128xf32> -> vector<16x128xf32>
    %c0_3 = arith.constant 0 : index
    %c0_4 = arith.constant 0 : index
    %4 = vector.load %arg5[%c0_3, %c0_4] : memref<6x128xf32, #tpu.memory_space<vmem>>, vector<1x128xf32>
    %5 = vector.broadcast %4 : vector<1x128xf32> to vector<16x128xf32>
    %6 = arith.addf %3, %5 : vector<16x128xf32>
    %cst_5 = arith.constant 0.000000e+00 : f32
    %7 = vector.broadcast %cst_5 : f32 to vector<16x128xf32>
    %8 = arith.maximumf %6, %7 : vector<16x128xf32>
    %9 = arith.truncf %8 : vector<16x128xf32> to vector<16x128xbf16>
    %c0_6 = arith.constant 0 : index
    %c0_7 = arith.constant 0 : index
    %c0_8 = arith.constant 0 : index
    %10 = vector.load %arg3[%c0_6, %c0_7, %c0_8] : memref<5x128x128xbf16, #tpu.memory_space<vmem>>, vector<1x128x128xbf16>
    %11 = vector.shape_cast %10 : vector<1x128x128xbf16> to vector<128x128xbf16>
    %cst_9 = arith.constant dense<0.000000e+00> : vector<16x128xf32>
    %12 = tpu.matmul %9, %11, %cst_9 {dimension_numbers = #tpu.dot_dimension_numbers<[1], [0], [0], [1], [0, 0, 1, 1], [], []>} : vector<16x128xbf16>, vector<128x128xbf16>, vector<16x128xf32> -> vector<16x128xf32>
    %c1 = arith.constant 1 : index
    %c0_10 = arith.constant 0 : index
    %13 = vector.load %arg5[%c1, %c0_10] : memref<6x128xf32, #tpu.memory_space<vmem>>, vector<1x128xf32>
    %14 = vector.broadcast %13 : vector<1x128xf32> to vector<16x128xf32>
    %15 = arith.addf %12, %14 : vector<16x128xf32>
    %cst_11 = arith.constant 0.000000e+00 : f32
    %16 = vector.broadcast %cst_11 : f32 to vector<16x128xf32>
    %17 = arith.maximumf %15, %16 : vector<16x128xf32>
    %18 = arith.truncf %17 : vector<16x128xf32> to vector<16x128xbf16>
    %c1_12 = arith.constant 1 : index
    %c0_13 = arith.constant 0 : index
    %c0_14 = arith.constant 0 : index
    %19 = vector.load %arg3[%c1_12, %c0_13, %c0_14] : memref<5x128x128xbf16, #tpu.memory_space<vmem>>, vector<1x128x128xbf16>
    %20 = vector.shape_cast %19 : vector<1x128x128xbf16> to vector<128x128xbf16>
    %cst_15 = arith.constant dense<0.000000e+00> : vector<16x128xf32>
    %21 = tpu.matmul %18, %20, %cst_15 {dimension_numbers = #tpu.dot_dimension_numbers<[1], [0], [0], [1], [0, 0, 1, 1], [], []>} : vector<16x128xbf16>, vector<128x128xbf16>, vector<16x128xf32> -> vector<16x128xf32>
    %c2 = arith.constant 2 : index
    %c0_16 = arith.constant 0 : index
    %22 = vector.load %arg5[%c2, %c0_16] : memref<6x128xf32, #tpu.memory_space<vmem>>, vector<1x128xf32>
    %23 = vector.broadcast %22 : vector<1x128xf32> to vector<16x128xf32>
    %24 = arith.addf %21, %23 : vector<16x128xf32>
    %cst_17 = arith.constant 0.000000e+00 : f32
    %25 = vector.broadcast %cst_17 : f32 to vector<16x128xf32>
    %26 = arith.maximumf %24, %25 : vector<16x128xf32>
    %27 = arith.truncf %26 : vector<16x128xf32> to vector<16x128xbf16>
    %c2_18 = arith.constant 2 : index
    %c0_19 = arith.constant 0 : index
    %c0_20 = arith.constant 0 : index
    %28 = vector.load %arg3[%c2_18, %c0_19, %c0_20] : memref<5x128x128xbf16, #tpu.memory_space<vmem>>, vector<1x128x128xbf16>
    %29 = vector.shape_cast %28 : vector<1x128x128xbf16> to vector<128x128xbf16>
    %cst_21 = arith.constant dense<0.000000e+00> : vector<16x128xf32>
    %30 = tpu.matmul %27, %29, %cst_21 {dimension_numbers = #tpu.dot_dimension_numbers<[1], [0], [0], [1], [0, 0, 1, 1], [], []>} : vector<16x128xbf16>, vector<128x128xbf16>, vector<16x128xf32> -> vector<16x128xf32>
    %c3 = arith.constant 3 : index
    %c0_22 = arith.constant 0 : index
    %31 = vector.load %arg5[%c3, %c0_22] : memref<6x128xf32, #tpu.memory_space<vmem>>, vector<1x128xf32>
    %32 = vector.broadcast %31 : vector<1x128xf32> to vector<16x128xf32>
    %33 = arith.addf %30, %32 : vector<16x128xf32>
    %cst_23 = arith.constant 0.000000e+00 : f32
    %34 = vector.broadcast %cst_23 : f32 to vector<16x128xf32>
    %35 = arith.maximumf %33, %34 : vector<16x128xf32>
    %36 = arith.truncf %35 : vector<16x128xf32> to vector<16x128xbf16>
    %c3_24 = arith.constant 3 : index
    %c0_25 = arith.constant 0 : index
    %c0_26 = arith.constant 0 : index
    %37 = vector.load %arg3[%c3_24, %c0_25, %c0_26] : memref<5x128x128xbf16, #tpu.memory_space<vmem>>, vector<1x128x128xbf16>
    %38 = vector.shape_cast %37 : vector<1x128x128xbf16> to vector<128x128xbf16>
    %cst_27 = arith.constant dense<0.000000e+00> : vector<16x128xf32>
    %39 = tpu.matmul %36, %38, %cst_27 {dimension_numbers = #tpu.dot_dimension_numbers<[1], [0], [0], [1], [0, 0, 1, 1], [], []>} : vector<16x128xbf16>, vector<128x128xbf16>, vector<16x128xf32> -> vector<16x128xf32>
    %c4 = arith.constant 4 : index
    %c0_28 = arith.constant 0 : index
    %40 = vector.load %arg5[%c4, %c0_28] : memref<6x128xf32, #tpu.memory_space<vmem>>, vector<1x128xf32>
    %41 = vector.broadcast %40 : vector<1x128xf32> to vector<16x128xf32>
    %42 = arith.addf %39, %41 : vector<16x128xf32>
    %cst_29 = arith.constant 0.000000e+00 : f32
    %43 = vector.broadcast %cst_29 : f32 to vector<16x128xf32>
    %44 = arith.maximumf %42, %43 : vector<16x128xf32>
    %45 = arith.truncf %44 : vector<16x128xf32> to vector<16x128xbf16>
    %c4_30 = arith.constant 4 : index
    %c0_31 = arith.constant 0 : index
    %c0_32 = arith.constant 0 : index
    %46 = vector.load %arg3[%c4_30, %c0_31, %c0_32] : memref<5x128x128xbf16, #tpu.memory_space<vmem>>, vector<1x128x128xbf16>
    %47 = vector.shape_cast %46 : vector<1x128x128xbf16> to vector<128x128xbf16>
    %cst_33 = arith.constant dense<0.000000e+00> : vector<16x128xf32>
    %48 = tpu.matmul %45, %47, %cst_33 {dimension_numbers = #tpu.dot_dimension_numbers<[1], [0], [0], [1], [0, 0, 1, 1], [], []>} : vector<16x128xbf16>, vector<128x128xbf16>, vector<16x128xf32> -> vector<16x128xf32>
    %c5 = arith.constant 5 : index
    %c0_34 = arith.constant 0 : index
    %49 = vector.load %arg5[%c5, %c0_34] : memref<6x128xf32, #tpu.memory_space<vmem>>, vector<1x128xf32>
    %50 = vector.broadcast %49 : vector<1x128xf32> to vector<16x128xf32>
    %51 = arith.addf %48, %50 : vector<16x128xf32>
    %cst_35 = arith.constant 0.000000e+00 : f32
    %52 = vector.broadcast %cst_35 : f32 to vector<16x128xf32>
    %53 = arith.maximumf %51, %52 : vector<16x128xf32>
    %54 = arith.truncf %53 : vector<16x128xf32> to vector<16x128xbf16>
    %c0_36 = arith.constant 0 : index
    %c0_37 = arith.constant 0 : index
    %55 = vector.load %arg4[%c0_36, %c0_37] : memref<128x784xbf16, #tpu.memory_space<vmem>>, vector<128x784xbf16>
    %cst_38 = arith.constant dense<0.000000e+00> : vector<16x784xf32>
    %56 = tpu.matmul %54, %55, %cst_38 {dimension_numbers = #tpu.dot_dimension_numbers<[1], [0], [0], [1], [0, 0, 1, 1], [], []>} : vector<16x128xbf16>, vector<128x784xbf16>, vector<16x784xf32> -> vector<16x784xf32>
    %c0_39 = arith.constant 0 : index
    %c0_40 = arith.constant 0 : index
    %57 = vector.load %arg6[%c0_39, %c0_40] : memref<1x784xf32, #tpu.memory_space<vmem>>, vector<1x784xf32>
    %58 = vector.broadcast %57 : vector<1x784xf32> to vector<16x784xf32>
    %59 = arith.addf %56, %58 : vector<16x784xf32>
    %60 = math.tanh %59 : vector<16x784xf32>
    %c0_41 = arith.constant 0 : index
    %c0_42 = arith.constant 0 : index
    %61 = vector.load %arg7[%c0_41, %c0_42] : memref<16x784xf32, #tpu.memory_space<vmem>>, vector<16x784xf32>
    tpu.vector_store %arg7[%c0_41, %c0_42], %60 {strides = array<i32>} : memref<16x784xf32, #tpu.memory_space<vmem>>, vector<16x784xf32>,
    return
  }
  func.func @transform_0(%arg0: i32) -> (i32, i32) {
    %c0_i32 = arith.constant 0 : i32
    %c0_i32_0 = arith.constant 0 : i32
    return %arg0, %c0_i32 : i32, i32
  }
  func.func @transform_1(%arg0: i32) -> (i32, i32) {
    %c0_i32 = arith.constant 0 : i32
    %c0_i32_0 = arith.constant 0 : i32
    %c0_i32_1 = arith.constant 0 : i32
    return %c0_i32, %c0_i32_0 : i32, i32
  }
  func.func @transform_2(%arg0: i32) -> (i32, i32, i32) {
    %c0_i32 = arith.constant 0 : i32
    %c0_i32_0 = arith.constant 0 : i32
    %c0_i32_1 = arith.constant 0 : i32
    %c0_i32_2 = arith.constant 0 : i32
    return %c0_i32, %c0_i32_0, %c0_i32_1 : i32, i32, i32
  }
  func.func @transform_3(%arg0: i32) -> (i32, i32) {
    %c0_i32 = arith.constant 0 : i32
    %c0_i32_0 = arith.constant 0 : i32
    %c0_i32_1 = arith.constant 0 : i32
    return %c0_i32, %c0_i32_0 : i32, i32
  }
  func.func @transform_4(%arg0: i32) -> (i32, i32) {
    %c0_i32 = arith.constant 0 : i32
    %c0_i32_0 = arith.constant 0 : i32
    %c0_i32_1 = arith.constant 0 : i32
    return %c0_i32, %c0_i32_0 : i32, i32
  }
  func.func @transform_5(%arg0: i32) -> (i32, i32) {
    %c0_i32 = arith.constant 0 : i32
    %c0_i32_0 = arith.constant 0 : i32
    %c0_i32_1 = arith.constant 0 : i32
    return %c0_i32, %c0_i32_0 : i32, i32
  }
  func.func @transform_6(%arg0: i32) -> (i32, i32) {
    %c0_i32 = arith.constant 0 : i32
    %c0_i32_0 = arith.constant 0 : i32
    return %arg0, %c0_i32 : i32, i32
  }
}

</mosaic_0001>

<llo_original>
// kernel: autoencoder_forward_packed.1
$region0: #{autoencoder_forward_packed.1}
  #allocation0 [shape = 'u32[]', space=smem, size = 0x4, offset = 0x4, fixed_abs, tag = 'smem constant byte address 0x4 - core index']
  #allocation1 [shape = 'u32[144,128]{1,0:T(1,128)}', space=vmem, size = 0x12000, scoped, tag = 'internal scratch']
  %s0 = inlined_call_operand.vmem [shape: f32[16,784], index: 0, kind: input, shape index: {}]
  %s1 = inlined_call_operand.vmem [shape: bf16[784,128], index: 1, kind: input, shape index: {}]
  %s2 = inlined_call_operand.vmem [shape: bf16[5,128,128], index: 2, kind: input, shape index: {}]
  %s3 = inlined_call_operand.vmem [shape: bf16[128,784], index: 3, kind: input, shape index: {}]
  %s4 = inlined_call_operand.vmem [shape: f32[6,128], index: 4, kind: input, shape index: {}]
  %s5 = inlined_call_operand.vmem [shape: f32[1,784], index: 5, kind: input, shape index: {}]
  %s6 = inlined_call_operand.vmem [shape: f32[16,784], index: 6, kind: output, shape index: {}]
  %s7 = sld [smem:[#allocation0]]
  $region34: #{autoencoder_forward_packed.1} parent=0
    _
  %s9 = ssub.s32 1, %s7
  %s10 = scalar_select 0, %s9, %s7
  // Predicated region
  $region2: #{autoencoder_forward_packed.1} parent=0 // pred_check
    _
  $region3: #{autoencoder_forward_packed.1} parent=0 // pred_check_branch
    %12 = sbr.rel (0) target = $region5
  $region4: #{autoencoder_forward_packed.1} parent=0 // pred_region
    _
  $region5: #{autoencoder_forward_packed.1} parent=0 // pred_fallthru
    _
  // Predicated region
  $region6: #{autoencoder_forward_packed.1} parent=0 // pred_check
    _
  $region7: #{autoencoder_forward_packed.1} parent=0 // pred_check_branch
    %14 = sbr.rel (0) target = $region9
  $region8: #{autoencoder_forward_packed.1} parent=0 // pred_region
    _
  $region9: #{autoencoder_forward_packed.1} parent=0 // pred_fallthru
    _
  // Predicated region
  $region10: #{autoencoder_forward_packed.1} parent=0 // pred_check
    _
  $region11: #{autoencoder_forward_packed.1} parent=0 // pred_check_branch
    %16 = sbr.rel (0) target = $region13
  $region12: #{autoencoder_forward_packed.1} parent=0 // pred_region
    _
  $region13: #{autoencoder_forward_packed.1} parent=0 // pred_fallthru
    _
  // Predicated region
  $region14: #{autoencoder_forward_packed.1} parent=0 // pred_check
    _
  $region15: #{autoencoder_forward_packed.1} parent=0 // pred_check_branch
    %18 = sbr.rel (0) target = $region17
  $region16: #{autoencoder_forward_packed.1} parent=0 // pred_region
    _
  $region17: #{autoencoder_forward_packed.1} parent=0 // pred_fallthru
    _
  // Predicated region
  $region18: #{autoencoder_forward_packed.1} parent=0 // pred_check
    _
  $region19: #{autoencoder_forward_packed.1} parent=0 // pred_check_branch
    %20 = sbr.rel (0) target = $region21
  $region20: #{autoencoder_forward_packed.1} parent=0 // pred_region
    _
  $region21: #{autoencoder_forward_packed.1} parent=0 // pred_fallthru
    _
  // Predicated region
  $region22: #{autoencoder_forward_packed.1} parent=0 // pred_check
    _
  $region23: #{autoencoder_forward_packed.1} parent=0 // pred_check_branch
    %22 = sbr.rel (0) target = $region25
  $region24: #{autoencoder_forward_packed.1} parent=0 // pred_region
    _
  $region25: #{autoencoder_forward_packed.1} parent=0 // pred_fallthru
    _
  %v24 = vld [vmem:[%s0] sm:$0xff]
  %v25 = vld [vmem:[%s0 + $0x8] sm:$0xff]
  %v26 = vld [vmem:[%s0 + $0x10] sm:$0xff]
  %v27 = vld [vmem:[%s0 + $0x18] sm:$0xff]
  %v28 = vld [vmem:[%s0 + $0x20] sm:$0xff]
  %v29 = vld [vmem:[%s0 + $0x28] sm:$0xff]
  %v30 = vld [vmem:[%s0 + $0x30] sm:$0xff]
  %v31 = vld [vmem:[%s0 + $0x38] sm:$0xff]
  %v32 = vld [vmem:[%s0 + $0x40] sm:$0xff]
  %v33 = vld [vmem:[%s0 + $0x48] sm:$0xff]
  %v34 = vld [vmem:[%s0 + $0x50] sm:$0xff]
  %v35 = vld [vmem:[%s0 + $0x58] sm:$0xff]
  %v36 = vld [vmem:[%s0 + $0x60] sm:$0xff]
  %v37 = vld [vmem:[%s0 + $0x68] sm:$0xff]
  %v38 = vpack.c.bf16 %v31, %v24
  %v39 = vpack.c.bf16 %v32, %v25
  %v40 = vpack.c.bf16 %v33, %v26
  %v41 = vpack.c.bf16 %v34, %v27
  %v42 = vpack.c.bf16 %v35, %v28
  %v43 = vpack.c.bf16 %v36, %v29
  %v44 = vpack.c.bf16 %v37, %v30
  %v45 = vld [vmem:[%s1] sm:$0xf]
  %v46 = vld [vmem:[%s1 + $0x4] sm:$0xf]
  %v47 = vld [vmem:[%s1 + $0x8] sm:$0xf]
  %v48 = vld [vmem:[%s1 + $0xc] sm:$0xf]
  %v49 = vld [vmem:[%s1 + $0x10] sm:$0xf]
  %v50 = vld [vmem:[%s1 + $0x14] sm:$0xf]
  %v51 = vld [vmem:[%s1 + $0x18] sm:$0xf]
  %v52 = vld [vmem:[%s1 + $0x1c] sm:$0xf]
  %v53 = vld [vmem:[%s1 + $0x20] sm:$0xf]
  %v54 = vld [vmem:[%s1 + $0x24] sm:$0xf]
  %v55 = vld [vmem:[%s1 + $0x28] sm:$0xf]
  %v56 = vld [vmem:[%s1 + $0x2c] sm:$0xf]
  %v57 = vld [vmem:[%s1 + $0x30] sm:$0xf]
  %v58 = vld [vmem:[%s1 + $0x34] sm:$0xf]
  %v59 = vld [vmem:[%s1 + $0x38] sm:$0xf]
  %v60 = vld [vmem:[%s1 + $0x3c] sm:$0xf]
  %v61 = vld [vmem:[%s1 + $0x40] sm:$0xf]
  %v62 = vld [vmem:[%s1 + $0x44] sm:$0xf]
  %v63 = vld [vmem:[%s1 + $0x48] sm:$0xf]
  %v64 = vld [vmem:[%s1 + $0x4c] sm:$0xf]
  %v65 = vld [vmem:[%s1 + $0x50] sm:$0xf]
  %v66 = vld [vmem:[%s1 + $0x54] sm:$0xf]
  %v67 = vld [vmem:[%s1 + $0x58] sm:$0xf]
  %v68 = vld [vmem:[%s1 + $0x5c] sm:$0xf]
  %v69 = vld [vmem:[%s1 + $0x60] sm:$0xf]
  %v70 = vld [vmem:[%s1 + $0x64] sm:$0xf]
  %v71 = vld [vmem:[%s1 + $0x68] sm:$0xf]
  %v72 = vld [vmem:[%s1 + $0x6c] sm:$0xf]
  %v73 = vld [vmem:[%s1 + $0x70] sm:$0xf]
  %v74 = vld [vmem:[%s1 + $0x74] sm:$0xf]
  %v75 = vld [vmem:[%s1 + $0x78] sm:$0xf]
  %v76 = vld [vmem:[%s1 + $0x7c] sm:$0xf]
  %v77 = vld [vmem:[%s1 + $0x80] sm:$0xf]
  %v78 = vld [vmem:[%s1 + $0x84] sm:$0xf]
  %v79 = vld [vmem:[%s1 + $0x88] sm:$0xf]
  %v80 = vld [vmem:[%s1 + $0x8c] sm:$0xf]
  %v81 = vld [vmem:[%s1 + $0x90] sm:$0xf]
  %v82 = vld [vmem:[%s1 + $0x94] sm:$0xf]
  %v83 = vld [vmem:[%s1 + $0x98] sm:$0xf]
  %v84 = vld [vmem:[%s1 + $0x9c] sm:$0xf]
  %v85 = vld [vmem:[%s1 + $0xa0] sm:$0xf]
  %v86 = vld [vmem:[%s1 + $0xa4] sm:$0xf]
  %v87 = vld [vmem:[%s1 + $0xa8] sm:$0xf]
  %v88 = vld [vmem:[%s1 + $0xac] sm:$0xf]
  %v89 = vld [vmem:[%s1 + $0xb0] sm:$0xf]
  %v90 = vld [vmem:[%s1 + $0xb4] sm:$0xf]
  %v91 = vld [vmem:[%s1 + $0xb8] sm:$0xf]
  %v92 = vld [vmem:[%s1 + $0xbc] sm:$0xf]
  %v93 = vld [vmem:[%s1 + $0xc0] sm:$0xf]
  %v94 = vld [vmem:[%s1 + $0xc4] sm:$0xf]
  %v95 = vld [vmem:[%s1 + $0xc8] sm:$0xf]
  %v96 = vld [vmem:[%s1 + $0xcc] sm:$0xf]
  %v97 = vld [vmem:[%s1 + $0xd0] sm:$0xf]
  %v98 = vld [vmem:[%s1 + $0xd4] sm:$0xf]
  %v99 = vld [vmem:[%s1 + $0xd8] sm:$0xf]
  %v100 = vld [vmem:[%s1 + $0xdc] sm:$0xf]
  %v101 = vld [vmem:[%s1 + $0xe0] sm:$0xf]
  %v102 = vld [vmem:[%s1 + $0xe4] sm:$0xf]
  %v103 = vld [vmem:[%s1 + $0xe8] sm:$0xf]
  %v104 = vld [vmem:[%s1 + $0xec] sm:$0xf]
  %v105 = vld [vmem:[%s1 + $0xf0] sm:$0xf]
  %v106 = vld [vmem:[%s1 + $0xf4] sm:$0xf]
  %v107 = vld [vmem:[%s1 + $0xf8] sm:$0xf]
  %v108 = vld [vmem:[%s1 + $0xfc] sm:$0xf]
  %v109 = vld [vmem:[%s1 + $0x100] sm:$0xf]
  %v110 = vld [vmem:[%s1 + $0x104] sm:$0xf]
  %v111 = vld [vmem:[%s1 + $0x108] sm:$0xf]
  %v112 = vld [vmem:[%s1 + $0x10c] sm:$0xf]
  %v113 = vld [vmem:[%s1 + $0x110] sm:$0xf]
  %v114 = vld [vmem:[%s1 + $0x114] sm:$0xf]
  %v115 = vld [vmem:[%s1 + $0x118] sm:$0xf]
  %v116 = vld [vmem:[%s1 + $0x11c] sm:$0xf]
  %v117 = vld [vmem:[%s1 + $0x120] sm:$0xf]
  %v118 = vld [vmem:[%s1 + $0x124] sm:$0xf]
  %v119 = vld [vmem:[%s1 + $0x128] sm:$0xf]
  %v120 = vld [vmem:[%s1 + $0x12c] sm:$0xf]
  %v121 = vld [vmem:[%s1 + $0x130] sm:$0xf]
  %v122 = vld [vmem:[%s1 + $0x134] sm:$0xf]
  %v123 = vld [vmem:[%s1 + $0x138] sm:$0xf]
  %v124 = vld [vmem:[%s1 + $0x13c] sm:$0xf]
  %v125 = vld [vmem:[%s1 + $0x140] sm:$0xf]
  %v126 = vld [vmem:[%s1 + $0x144] sm:$0xf]
  %v127 = vld [vmem:[%s1 + $0x148] sm:$0xf]
  %v128 = vld [vmem:[%s1 + $0x14c] sm:$0xf]
  %v129 = vld [vmem:[%s1 + $0x150] sm:$0xf]
  %v130 = vld [vmem:[%s1 + $0x154] sm:$0xf]
  %v131 = vld [vmem:[%s1 + $0x158] sm:$0xf]
  %v132 = vld [vmem:[%s1 + $0x15c] sm:$0xf]
  %v133 = vld [vmem:[%s1 + $0x160] sm:$0xf]
  %v134 = vld [vmem:[%s1 + $0x164] sm:$0xf]
  %v135 = vld [vmem:[%s1 + $0x168] sm:$0xf]
  %v136 = vld [vmem:[%s1 + $0x16c] sm:$0xf]
  %v137 = vld [vmem:[%s1 + $0x170] sm:$0xf]
  %v138 = vld [vmem:[%s1 + $0x174] sm:$0xf]
  %v139 = vld [vmem:[%s1 + $0x178] sm:$0xf]
  %v140 = vld [vmem:[%s1 + $0x17c] sm:$0xf]
  %v141 = vld [vmem:[%s1 + $0x180] sm:$0xf]
  %v142 = vld [vmem:[%s1 + $0x184] sm:$0xf]
  %v143 = vld [vmem:[%s4] sm:$0x1]
  %v144 = vlaneseq
  %v145 = vshrl.u32 %v144, 7
  %v146 = vsub.s32 0, %v145
  %v147 = vrot.slane %v143, %v146
  %v246 = vunpack.c.l.b16 %v45
  %v247 = vunpack.c.l.b16 %v46
  %v248 = vunpack.c.l.b16 %v47
  %v249 = vunpack.c.l.b16 %v48
  %v250 = vunpack.c.l.b16 %v49
  %v251 = vunpack.c.l.b16 %v50
  %v252 = vunpack.c.l.b16 %v51
  %v253 = vunpack.c.l.b16 %v52
  %v254 = vunpack.c.l.b16 %v53
  %v255 = vunpack.c.l.b16 %v54
  %v256 = vunpack.c.l.b16 %v55
  %v257 = vunpack.c.l.b16 %v56
  %v258 = vunpack.c.l.b16 %v57
  %v259 = vunpack.c.l.b16 %v58
  %v260 = vunpack.c.l.b16 %v59
  %v261 = vunpack.c.l.b16 %v60
  %v262 = vunpack.c.l.b16 %v61
  %v263 = vunpack.c.l.b16 %v62
  %v264 = vunpack.c.l.b16 %v63
  %v265 = vunpack.c.l.b16 %v64
  %v266 = vunpack.c.l.b16 %v65
  %v267 = vunpack.c.l.b16 %v66
  %v268 = vunpack.c.l.b16 %v67
  %v269 = vunpack.c.l.b16 %v68
  %v270 = vunpack.c.l.b16 %v69
  %v271 = vunpack.c.l.b16 %v70
  %v272 = vunpack.c.l.b16 %v71
  %v273 = vunpack.c.l.b16 %v72
  %v274 = vunpack.c.l.b16 %v73
  %v275 = vunpack.c.l.b16 %v74
  %v276 = vunpack.c.l.b16 %v75
  %v277 = vunpack.c.l.b16 %v76
  %v278 = vunpack.c.l.b16 %v77
  %v279 = vunpack.c.l.b16 %v78
  %v280 = vunpack.c.l.b16 %v79
  %v281 = vunpack.c.l.b16 %v80
  %v282 = vunpack.c.l.b16 %v81
  %v283 = vunpack.c.l.b16 %v82
  %v284 = vunpack.c.l.b16 %v83
  %v285 = vunpack.c.l.b16 %v84
  %v286 = vunpack.c.l.b16 %v85
  %v287 = vunpack.c.l.b16 %v86
  %v288 = vunpack.c.l.b16 %v87
  %v289 = vunpack.c.l.b16 %v88
  %v290 = vunpack.c.l.b16 %v89
  %v291 = vunpack.c.l.b16 %v90
  %v292 = vunpack.c.l.b16 %v91
  %v293 = vunpack.c.l.b16 %v92
  %v294 = vunpack.c.l.b16 %v93
  %v295 = vunpack.c.l.b16 %v94
  %v296 = vunpack.c.l.b16 %v95
  %v297 = vunpack.c.l.b16 %v96
  %v298 = vunpack.c.l.b16 %v97
  %v299 = vunpack.c.l.b16 %v98
  %v300 = vunpack.c.l.b16 %v99
  %v301 = vunpack.c.l.b16 %v100
  %v302 = vunpack.c.l.b16 %v101
  %v303 = vunpack.c.l.b16 %v102
  %v304 = vunpack.c.l.b16 %v103
  %v305 = vunpack.c.l.b16 %v104
  %v306 = vunpack.c.l.b16 %v105
  %v307 = vunpack.c.l.b16 %v106
  %v308 = vunpack.c.l.b16 %v107
  %v309 = vunpack.c.l.b16 %v108
  %v310 = vunpack.c.l.b16 %v109
  %v311 = vunpack.c.l.b16 %v110
  %v312 = vunpack.c.l.b16 %v111
  %v313 = vunpack.c.l.b16 %v112
  %v314 = vunpack.c.l.b16 %v113
  %v315 = vunpack.c.l.b16 %v114
  %v316 = vunpack.c.l.b16 %v115
  %v317 = vunpack.c.l.b16 %v116
  %v318 = vunpack.c.l.b16 %v117
  %v319 = vunpack.c.l.b16 %v118
  %v320 = vunpack.c.l.b16 %v119
  %v321 = vunpack.c.l.b16 %v120
  %v322 = vunpack.c.l.b16 %v121
  %v323 = vunpack.c.l.b16 %v122
  %v324 = vunpack.c.l.b16 %v123
  %v325 = vunpack.c.l.b16 %v124
  %v326 = vunpack.c.l.b16 %v125
  %v327 = vunpack.c.l.b16 %v126
  %v328 = vunpack.c.l.b16 %v127
  %v329 = vunpack.c.l.b16 %v128
  %v330 = vunpack.c.l.b16 %v129
  %v331 = vunpack.c.l.b16 %v130
  %v332 = vunpack.c.l.b16 %v131
  %v333 = vunpack.c.l.b16 %v132
  %v334 = vunpack.c.l.b16 %v133
  %v335 = vunpack.c.l.b16 %v134
  %v336 = vunpack.c.l.b16 %v135
  %v337 = vunpack.c.l.b16 %v136
  %v338 = vunpack.c.l.b16 %v137
  %v339 = vunpack.c.l.b16 %v138
  %v340 = vunpack.c.l.b16 %v139
  %v341 = vunpack.c.l.b16 %v140
  %v342 = vunpack.c.l.b16 %v141
  %v343 = vunpack.c.l.b16 %v142
  %v344 = vpack.c.b16 %v247, %v246
  %v345 = vpack.c.b16 %v249, %v248
  %v346 = vpack.c.b16 %v251, %v250
  %v347 = vpack.c.b16 %v253, %v252
  %v348 = vpack.c.b16 %v255, %v254
  %v349 = vpack.c.b16 %v257, %v256
  %v350 = vpack.c.b16 %v259, %v258
  %v351 = vpack.c.b16 %v261, %v260
  %v352 = vpack.c.b16 %v263, %v262
  %v353 = vpack.c.b16 %v265, %v264
  %v354 = vpack.c.b16 %v267, %v266
  %v355 = vpack.c.b16 %v269, %v268
  %v356 = vpack.c.b16 %v271, %v270
  %v357 = vpack.c.b16 %v273, %v272
  %v358 = vpack.c.b16 %v275, %v274
  %v359 = vpack.c.b16 %v277, %v276
  %v360 = vpack.c.b16 %v279, %v278
  %v361 = vpack.c.b16 %v281, %v280
  %v362 = vpack.c.b16 %v283, %v282
  %v363 = vpack.c.b16 %v285, %v284
  %v364 = vpack.c.b16 %v287, %v286
  %v365 = vpack.c.b16 %v289, %v288
  %v366 = vpack.c.b16 %v291, %v290
  %v367 = vpack.c.b16 %v293, %v292
  %v368 = vpack.c.b16 %v295, %v294
  %v369 = vpack.c.b16 %v297, %v296
  %v370 = vpack.c.b16 %v299, %v298
  %v371 = vpack.c.b16 %v301, %v300
  %v372 = vpack.c.b16 %v303, %v302
  %v373 = vpack.c.b16 %v305, %v304
  %v374 = vpack.c.b16 %v307, %v306
  %v375 = vpack.c.b16 %v309, %v308
  %v376 = vpack.c.b16 %v311, %v310
  %v377 = vpack.c.b16 %v313, %v312
  %v378 = vpack.c.b16 %v315, %v314
  %v379 = vpack.c.b16 %v317, %v316
  %v380 = vpack.c.b16 %v319, %v318
  %v381 = vpack.c.b16 %v321, %v320
  %v382 = vpack.c.b16 %v323, %v322
  %v383 = vpack.c.b16 %v325, %v324
  %v384 = vpack.c.b16 %v327, %v326
  %v385 = vpack.c.b16 %v329, %v328
  %v386 = vpack.c.b16 %v331, %v330
  %v387 = vpack.c.b16 %v333, %v332
  %v388 = vpack.c.b16 %v335, %v334
  %v389 = vpack.c.b16 %v337, %v336
  %v390 = vpack.c.b16 %v339, %v338
  %v391 = vpack.c.b16 %v341, %v340
  %v392 = vpack.c.b16 %v343, %v342
  %vm442 = vcmask 130048
  %v444 = vsel %vm442, %v44, 0
  %446 = vmatprep.subr.bf16.mxu0 0
  %447 = vmatpush1.bf16.msra.mxu0 %v344
  %448 = vmatprep.subr.bf16.mxu0 0
  %449 = vmatpush1.bf16.msra.mxu0 %v345
  %450 = vmatprep.subr.bf16.mxu0 0
  %451 = vmatpush1.bf16.msra.mxu0 %v346
  %452 = vmatprep.subr.bf16.mxu0 0
  %453 = vmatpush1.bf16.msra.mxu0 %v347
  %454 = vmatprep.subr.bf16.mxu0 0
  %455 = vmatpush1.bf16.msra.mxu0 %v348
  %456 = vmatprep.subr.bf16.mxu0 0
  %457 = vmatpush1.bf16.msra.mxu0 %v349
  %458 = vmatprep.subr.bf16.mxu0 0
  %459 = vmatpush1.bf16.msra.mxu0 %v350
  %460 = vmatprep.subr.bf16.mxu0 0
  %461 = vmatpush1.bf16.msra.mxu0 %v351
  %462 = vmatprep.subr.bf16.mxu0 0
  %463 = vmatpush1.bf16.msra.mxu0 %v352
  %464 = vmatprep.subr.bf16.mxu0 0
  %465 = vmatpush1.bf16.msra.mxu0 %v353
  %466 = vmatprep.subr.bf16.mxu0 0
  %467 = vmatpush1.bf16.msra.mxu0 %v354
  %468 = vmatprep.subr.bf16.mxu0 0
  %469 = vmatpush1.bf16.msra.mxu0 %v355
  %470 = vmatprep.subr.bf16.mxu0 0
  %471 = vmatpush1.bf16.msra.mxu0 %v356
  %472 = vmatprep.subr.bf16.mxu0 0
  %473 = vmatpush1.bf16.msra.mxu0 %v357
  %474 = vmatprep.subr.bf16.mxu0 0
  %475 = vmatpush1.bf16.msra.mxu0 %v358
  %476 = vmatprep.subr.bf16.mxu0 0
  %477 = vmatpush1.bf16.msra.mxu0 %v359
  %478 = vmatprep.mubr.bf16.mxu0 %v39
  %479 = vmatmul.mubr.bf16.gmra.mrb[0].mxu0 %v38
  %v480 = vpop.f32.mrb[0].mxu0
  %v481 = vadd.f32 %v147, %v480
  %v482 = vpop.f32.mrb[0].mxu0
  %v483 = vpop.f32.mrb[0].mxu0
  %v484 = vadd.f32 %v147, %v483
  %v485 = vpop.f32.mrb[0].mxu0
  %486 = vdwg.mxu0
  %487 = vmatprep.subr.bf16.mxu0 0
  %488 = vmatpush1.bf16.msra.mxu0 %v360
  %489 = vmatprep.subr.bf16.mxu0 0
  %490 = vmatpush1.bf16.msra.mxu0 %v361
  %491 = vmatprep.subr.bf16.mxu0 0
  %492 = vmatpush1.bf16.msra.mxu0 %v362
  %493 = vmatprep.subr.bf16.mxu0 0
  %494 = vmatpush1.bf16.msra.mxu0 %v363
  %495 = vmatprep.subr.bf16.mxu0 0
  %496 = vmatpush1.bf16.msra.mxu0 %v364
  %497 = vmatprep.subr.bf16.mxu0 0
  %498 = vmatpush1.bf16.msra.mxu0 %v365
  %499 = vmatprep.subr.bf16.mxu0 0
  %500 = vmatpush1.bf16.msra.mxu0 %v366
  %501 = vmatprep.subr.bf16.mxu0 0
  %502 = vmatpush1.bf16.msra.mxu0 %v367
  %503 = vmatprep.subr.bf16.mxu0 0
  %504 = vmatpush1.bf16.msra.mxu0 %v368
  %505 = vmatprep.subr.bf16.mxu0 0
  %506 = vmatpush1.bf16.msra.mxu0 %v369
  %507 = vmatprep.subr.bf16.mxu0 0
  %508 = vmatpush1.bf16.msra.mxu0 %v370
  %509 = vmatprep.subr.bf16.mxu0 0
  %510 = vmatpush1.bf16.msra.mxu0 %v371
  %511 = vmatprep.subr.bf16.mxu0 0
  %512 = vmatpush1.bf16.msra.mxu0 %v372
  %513 = vmatprep.subr.bf16.mxu0 0
  %514 = vmatpush1.bf16.msra.mxu0 %v373
  %515 = vmatprep.subr.bf16.mxu0 0
  %516 = vmatpush1.bf16.msra.mxu0 %v374
  %517 = vmatprep.subr.bf16.mxu0 0
  %518 = vmatpush1.bf16.msra.mxu0 %v375
  %519 = vmatprep.mubr.bf16.mxu0 %v41
  %520 = vmatmul.mubr.bf16.gmra.mrb[0].mxu0 %v40
  %v521 = vpop.f32.mrb[0].mxu0
  %v522 = vadd.f32 %v481, %v521
  %v523 = vpop.f32.mrb[0].mxu0
  %v524 = vpop.f32.mrb[0].mxu0
  %v525 = vadd.f32 %v484, %v524
  %v526 = vpop.f32.mrb[0].mxu0
  %527 = vdwg.mxu0
  %528 = vmatprep.subr.bf16.mxu0 0
  %529 = vmatpush1.bf16.msra.mxu0 %v376
  %530 = vmatprep.subr.bf16.mxu0 0
  %531 = vmatpush1.bf16.msra.mxu0 %v377
  %532 = vmatprep.subr.bf16.mxu0 0
  %533 = vmatpush1.bf16.msra.mxu0 %v378
  %534 = vmatprep.subr.bf16.mxu0 0
  %535 = vmatpush1.bf16.msra.mxu0 %v379
  %536 = vmatprep.subr.bf16.mxu0 0
  %537 = vmatpush1.bf16.msra.mxu0 %v380
  %538 = vmatprep.subr.bf16.mxu0 0
  %539 = vmatpush1.bf16.msra.mxu0 %v381
  %540 = vmatprep.subr.bf16.mxu0 0
  %541 = vmatpush1.bf16.msra.mxu0 %v382
  %542 = vmatprep.subr.bf16.mxu0 0
  %543 = vmatpush1.bf16.msra.mxu0 %v383
  %544 = vmatprep.subr.bf16.mxu0 0
  %545 = vmatpush1.bf16.msra.mxu0 %v384
  %546 = vmatprep.subr.bf16.mxu0 0
  %547 = vmatpush1.bf16.msra.mxu0 %v385
  %548 = vmatprep.subr.bf16.mxu0 0
  %549 = vmatpush1.bf16.msra.mxu0 %v386
  %550 = vmatprep.subr.bf16.mxu0 0
  %551 = vmatpush1.bf16.msra.mxu0 %v387
  %552 = vmatprep.subr.bf16.mxu0 0
  %553 = vmatpush1.bf16.msra.mxu0 %v388
  %554 = vmatprep.subr.bf16.mxu0 0
  %555 = vmatpush1.bf16.msra.mxu0 %v389
  %556 = vmatprep.subr.bf16.mxu0 0
  %557 = vmatpush1.bf16.msra.mxu0 %v390
  %558 = vmatprep.subr.bf16.mxu0 0
  %559 = vmatpush1.bf16.msra.mxu0 %v391
  %560 = vmatprep.mubr.bf16.mxu0 %v43
  %561 = vmatmul.mubr.bf16.gmra.mrb[0].mxu0 %v42
  %v562 = vpop.f32.mrb[0].mxu0
  %v563 = vadd.f32 %v522, %v562
  %v564 = vpop.f32.mrb[0].mxu0
  %v565 = vpop.f32.mrb[0].mxu0
  %v566 = vadd.f32 %v525, %v565
  %v567 = vpop.f32.mrb[0].mxu0
  %568 = vdwg.mxu0
  %569 = vmatprep.subr.bf16.mxu0 0
  %570 = vmatpush1.bf16.msra.mxu0 %v392
  %571 = vmatprep.subr.bf16.mxu0 0
  %572 = vmatpush1.bf16.msra.mxu0 0
  %573 = vmatprep.subr.bf16.mxu0 0
  %574 = vmatpush1.bf16.msra.mxu0 0
  %575 = vmatprep.subr.bf16.mxu0 0
  %576 = vmatpush1.bf16.msra.mxu0 0
  %577 = vmatprep.subr.bf16.mxu0 0
  %578 = vmatpush1.bf16.msra.mxu0 0
  %579 = vmatprep.subr.bf16.mxu0 0
  %580 = vmatpush1.bf16.msra.mxu0 0
  %581 = vmatprep.subr.bf16.mxu0 0
  %582 = vmatpush1.bf16.msra.mxu0 0
  %583 = vmatprep.subr.bf16.mxu0 0
  %584 = vmatpush1.bf16.msra.mxu0 0
  %585 = vmatprep.subr.bf16.mxu0 0
  %586 = vmatpush1.bf16.msra.mxu0 0
  %587 = vmatprep.subr.bf16.mxu0 0
  %588 = vmatpush1.bf16.msra.mxu0 0
  %589 = vmatprep.subr.bf16.mxu0 0
  %590 = vmatpush1.bf16.msra.mxu0 0
  %591 = vmatprep.subr.bf16.mxu0 0
  %592 = vmatpush1.bf16.msra.mxu0 0
  %593 = vmatprep.subr.bf16.mxu0 0
  %594 = vmatpush1.bf16.msra.mxu0 0
  %595 = vmatprep.subr.bf16.mxu0 0
  %596 = vmatpush1.bf16.msra.mxu0 0
  %597 = vmatprep.subr.bf16.mxu0 0
  %598 = vmatpush1.bf16.msra.mxu0 0
  %599 = vmatprep.subr.bf16.mxu0 0
  %600 = vmatpush1.bf16.msra.mxu0 0
  %601 = vmatprep.mubr.bf16.mxu0 0
  %602 = vmatmul.mubr.bf16.gmra.mrb[0].mxu0 %v444
  %v603 = vpop.f32.mrb[0].mxu0
  %v604 = vadd.f32 %v563, %v603
  %v605 = vpop.f32.mrb[0].mxu0
  %v606 = vpop.f32.mrb[0].mxu0
  %v607 = vadd.f32 %v566, %v606
  %v608 = vpop.f32.mrb[0].mxu0
  %609 = vdwg.mxu0
  %v610 = vmax.f32 %v604, 0.0
  %v611 = vmax.f32 %v607, 0.0
  %v612 = vpack.c.bf16 %v611, %v610
  %v613 = vld [vmem:[%s2] sm:$0xf]
  %v614 = vld [vmem:[%s2 + $0x4] sm:$0xf]
  %v615 = vld [vmem:[%s2 + $0x8] sm:$0xf]
  %v616 = vld [vmem:[%s2 + $0xc] sm:$0xf]
  %v617 = vld [vmem:[%s2 + $0x10] sm:$0xf]
  %v618 = vld [vmem:[%s2 + $0x14] sm:$0xf]
  %v619 = vld [vmem:[%s2 + $0x18] sm:$0xf]
  %v620 = vld [vmem:[%s2 + $0x1c] sm:$0xf]
  %v621 = vld [vmem:[%s2 + $0x20] sm:$0xf]
  %v622 = vld [vmem:[%s2 + $0x24] sm:$0xf]
  %v623 = vld [vmem:[%s2 + $0x28] sm:$0xf]
  %v624 = vld [vmem:[%s2 + $0x2c] sm:$0xf]
  %v625 = vld [vmem:[%s2 + $0x30] sm:$0xf]
  %v626 = vld [vmem:[%s2 + $0x34] sm:$0xf]
  %v627 = vld [vmem:[%s2 + $0x38] sm:$0xf]
  %v628 = vld [vmem:[%s2 + $0x3c] sm:$0xf]
  %v629 = vld [vmem:[%s4 + $0x1] sm:$0x1]
  %v630 = vlaneseq
  %v631 = vshrl.u32 %v630, 7
  %v632 = vsub.s32 0, %v631
  %v633 = vrot.slane %v629, %v632
  %v650 = vunpack.c.l.b16 %v613
  %v651 = vunpack.c.l.b16 %v614
  %v652 = vunpack.c.l.b16 %v615
  %v653 = vunpack.c.l.b16 %v616
  %v654 = vunpack.c.l.b16 %v617
  %v655 = vunpack.c.l.b16 %v618
  %v656 = vunpack.c.l.b16 %v619
  %v657 = vunpack.c.l.b16 %v620
  %v658 = vunpack.c.l.b16 %v621
  %v659 = vunpack.c.l.b16 %v622
  %v660 = vunpack.c.l.b16 %v623
  %v661 = vunpack.c.l.b16 %v624
  %v662 = vunpack.c.l.b16 %v625
  %v663 = vunpack.c.l.b16 %v626
  %v664 = vunpack.c.l.b16 %v627
  %v665 = vunpack.c.l.b16 %v628
  %v666 = vpack.c.b16 %v651, %v650
  %v667 = vpack.c.b16 %v653, %v652
  %v668 = vpack.c.b16 %v655, %v654
  %v669 = vpack.c.b16 %v657, %v656
  %v670 = vpack.c.b16 %v659, %v658
  %v671 = vpack.c.b16 %v661, %v660
  %v672 = vpack.c.b16 %v663, %v662
  %v673 = vpack.c.b16 %v665, %v664
  %682 = vmatprep.subr.bf16.mxu0 0
  %683 = vmatpush1.bf16.msra.mxu0 %v666
  %684 = vmatprep.subr.bf16.mxu0 0
  %685 = vmatpush1.bf16.msra.mxu0 %v667
  %686 = vmatprep.subr.bf16.mxu0 0
  %687 = vmatpush1.bf16.msra.mxu0 %v668
  %688 = vmatprep.subr.bf16.mxu0 0
  %689 = vmatpush1.bf16.msra.mxu0 %v669
  %690 = vmatprep.subr.bf16.mxu0 0
  %691 = vmatpush1.bf16.msra.mxu0 %v670
  %692 = vmatprep.subr.bf16.mxu0 0
  %693 = vmatpush1.bf16.msra.mxu0 %v671
  %694 = vmatprep.subr.bf16.mxu0 0
  %695 = vmatpush1.bf16.msra.mxu0 %v672
  %696 = vmatprep.subr.bf16.mxu0 0
  %697 = vmatpush1.bf16.msra.mxu0 %v673
  %698 = vmatprep.subr.bf16.mxu0 0
  %699 = vmatpush1.bf16.msra.mxu0 0
  %700 = vmatprep.subr.bf16.mxu0 0
  %701 = vmatpush1.bf16.msra.mxu0 0
  %702 = vmatprep.subr.bf16.mxu0 0
  %703 = vmatpush1.bf16.msra.mxu0 0
  %704 = vmatprep.subr.bf16.mxu0 0
  %705 = vmatpush1.bf16.msra.mxu0 0
  %706 = vmatprep.subr.bf16.mxu0 0
  %707 = vmatpush1.bf16.msra.mxu0 0
  %708 = vmatprep.subr.bf16.mxu0 0
  %709 = vmatpush1.bf16.msra.mxu0 0
  %710 = vmatprep.subr.bf16.mxu0 0
  %711 = vmatpush1.bf16.msra.mxu0 0
  %712 = vmatprep.subr.bf16.mxu0 0
  %713 = vmatpush1.bf16.msra.mxu0 0
  %714 = vmatprep.mubr.bf16.mxu0 0
  %715 = vmatmul.mubr.bf16.gmra.mrb[0].mxu0 %v612
  %v716 = vpop.f32.mrb[0].mxu0
  %v717 = vadd.f32 %v633, %v716
  %v718 = vpop.f32.mrb[0].mxu0
  %v719 = vpop.f32.mrb[0].mxu0
  %v720 = vadd.f32 %v633, %v719
  %v721 = vpop.f32.mrb[0].mxu0
  %722 = vdwg.mxu0
  %v723 = vmax.f32 %v717, 0.0
  %v724 = vmax.f32 %v720, 0.0
  %v725 = vpack.c.bf16 %v724, %v723
  %s726 = scalar_lea.vmem %s2, 64
  %v727 = vld [vmem:[%s726] sm:$0xf]
  %v728 = vld [vmem:[%s726 + $0x4] sm:$0xf]
  %v729 = vld [vmem:[%s726 + $0x8] sm:$0xf]
  %v730 = vld [vmem:[%s726 + $0xc] sm:$0xf]
  %v731 = vld [vmem:[%s726 + $0x10] sm:$0xf]
  %v732 = vld [vmem:[%s726 + $0x14] sm:$0xf]
  %v733 = vld [vmem:[%s726 + $0x18] sm:$0xf]
  %v734 = vld [vmem:[%s726 + $0x1c] sm:$0xf]
  %v735 = vld [vmem:[%s726 + $0x20] sm:$0xf]
  %v736 = vld [vmem:[%s726 + $0x24] sm:$0xf]
  %v737 = vld [vmem:[%s726 + $0x28] sm:$0xf]
  %v738 = vld [vmem:[%s726 + $0x2c] sm:$0xf]
  %v739 = vld [vmem:[%s726 + $0x30] sm:$0xf]
  %v740 = vld [vmem:[%s726 + $0x34] sm:$0xf]
  %v741 = vld [vmem:[%s726 + $0x38] sm:$0xf]
  %v742 = vld [vmem:[%s726 + $0x3c] sm:$0xf]
  %v743 = vld [vmem:[%s4 + $0x2] sm:$0x1]
  %v744 = vlaneseq
  %v745 = vshrl.u32 %v744, 7
  %v746 = vsub.s32 0, %v745
  %v747 = vrot.slane %v743, %v746
  %v764 = vunpack.c.l.b16 %v727
  %v765 = vunpack.c.l.b16 %v728
  %v766 = vunpack.c.l.b16 %v729
  %v767 = vunpack.c.l.b16 %v730
  %v768 = vunpack.c.l.b16 %v731
  %v769 = vunpack.c.l.b16 %v732
  %v770 = vunpack.c.l.b16 %v733
  %v771 = vunpack.c.l.b16 %v734
  %v772 = vunpack.c.l.b16 %v735
  %v773 = vunpack.c.l.b16 %v736
  %v774 = vunpack.c.l.b16 %v737
  %v775 = vunpack.c.l.b16 %v738
  %v776 = vunpack.c.l.b16 %v739
  %v777 = vunpack.c.l.b16 %v740
  %v778 = vunpack.c.l.b16 %v741
  %v779 = vunpack.c.l.b16 %v742
  %v780 = vpack.c.b16 %v765, %v764
  %v781 = vpack.c.b16 %v767, %v766
  %v782 = vpack.c.b16 %v769, %v768
  %v783 = vpack.c.b16 %v771, %v770
  %v784 = vpack.c.b16 %v773, %v772
  %v785 = vpack.c.b16 %v775, %v774
  %v786 = vpack.c.b16 %v777, %v776
  %v787 = vpack.c.b16 %v779, %v778
  %796 = vmatprep.subr.bf16.mxu0 0
  %797 = vmatpush1.bf16.msra.mxu0 %v780
  %798 = vmatprep.subr.bf16.mxu0 0
  %799 = vmatpush1.bf16.msra.mxu0 %v781
  %800 = vmatprep.subr.bf16.mxu0 0
  %801 = vmatpush1.bf16.msra.mxu0 %v782
  %802 = vmatprep.subr.bf16.mxu0 0
  %803 = vmatpush1.bf16.msra.mxu0 %v783
  %804 = vmatprep.subr.bf16.mxu0 0
  %805 = vmatpush1.bf16.msra.mxu0 %v784
  %806 = vmatprep.subr.bf16.mxu0 0
  %807 = vmatpush1.bf16.msra.mxu0 %v785
  %808 = vmatprep.subr.bf16.mxu0 0
  %809 = vmatpush1.bf16.msra.mxu0 %v786
  %810 = vmatprep.subr.bf16.mxu0 0
  %811 = vmatpush1.bf16.msra.mxu0 %v787
  %812 = vmatprep.subr.bf16.mxu0 0
  %813 = vmatpush1.bf16.msra.mxu0 0
  %814 = vmatprep.subr.bf16.mxu0 0
  %815 = vmatpush1.bf16.msra.mxu0 0
  %816 = vmatprep.subr.bf16.mxu0 0
  %817 = vmatpush1.bf16.msra.mxu0 0
  %818 = vmatprep.subr.bf16.mxu0 0
  %819 = vmatpush1.bf16.msra.mxu0 0
  %820 = vmatprep.subr.bf16.mxu0 0
  %821 = vmatpush1.bf16.msra.mxu0 0
  %822 = vmatprep.subr.bf16.mxu0 0
  %823 = vmatpush1.bf16.msra.mxu0 0
  %824 = vmatprep.subr.bf16.mxu0 0
  %825 = vmatpush1.bf16.msra.mxu0 0
  %826 = vmatprep.subr.bf16.mxu0 0
  %827 = vmatpush1.bf16.msra.mxu0 0
  %828 = vmatprep.mubr.bf16.mxu0 0
  %829 = vmatmul.mubr.bf16.gmra.mrb[0].mxu0 %v725
  %v830 = vpop.f32.mrb[0].mxu0
  %v831 = vadd.f32 %v747, %v830
  %v832 = vpop.f32.mrb[0].mxu0
  %v833 = vpop.f32.mrb[0].mxu0
  %v834 = vadd.f32 %v747, %v833
  %v835 = vpop.f32.mrb[0].mxu0
  %836 = vdwg.mxu0
  %v837 = vmax.f32 %v831, 0.0
  %v838 = vmax.f32 %v834, 0.0
  %v839 = vpack.c.bf16 %v838, %v837
  %s840 = scalar_lea.vmem %s2, 128
  %v841 = vld [vmem:[%s840] sm:$0xf]
  %v842 = vld [vmem:[%s840 + $0x4] sm:$0xf]
  %v843 = vld [vmem:[%s840 + $0x8] sm:$0xf]
  %v844 = vld [vmem:[%s840 + $0xc] sm:$0xf]
  %v845 = vld [vmem:[%s840 + $0x10] sm:$0xf]
  %v846 = vld [vmem:[%s840 + $0x14] sm:$0xf]
  %v847 = vld [vmem:[%s840 + $0x18] sm:$0xf]
  %v848 = vld [vmem:[%s840 + $0x1c] sm:$0xf]
  %v849 = vld [vmem:[%s840 + $0x20] sm:$0xf]
  %v850 = vld [vmem:[%s840 + $0x24] sm:$0xf]
  %v851 = vld [vmem:[%s840 + $0x28] sm:$0xf]
  %v852 = vld [vmem:[%s840 + $0x2c] sm:$0xf]
  %v853 = vld [vmem:[%s840 + $0x30] sm:$0xf]
  %v854 = vld [vmem:[%s840 + $0x34] sm:$0xf]
  %v855 = vld [vmem:[%s840 + $0x38] sm:$0xf]
  %v856 = vld [vmem:[%s840 + $0x3c] sm:$0xf]
  %v857 = vld [vmem:[%s4 + $0x3] sm:$0x1]
  %v858 = vlaneseq
  %v859 = vshrl.u32 %v858, 7
  %v860 = vsub.s32 0, %v859
  %v861 = vrot.slane %v857, %v860
  %v878 = vunpack.c.l.b16 %v841
  %v879 = vunpack.c.l.b16 %v842
  %v880 = vunpack.c.l.b16 %v843
  %v881 = vunpack.c.l.b16 %v844
  %v882 = vunpack.c.l.b16 %v845
  %v883 = vunpack.c.l.b16 %v846
  %v884 = vunpack.c.l.b16 %v847
  %v885 = vunpack.c.l.b16 %v848
  %v886 = vunpack.c.l.b16 %v849
  %v887 = vunpack.c.l.b16 %v850
  %v888 = vunpack.c.l.b16 %v851
  %v889 = vunpack.c.l.b16 %v852
  %v890 = vunpack.c.l.b16 %v853
  %v891 = vunpack.c.l.b16 %v854
  %v892 = vunpack.c.l.b16 %v855
  %v893 = vunpack.c.l.b16 %v856
  %v894 = vpack.c.b16 %v879, %v878
  %v895 = vpack.c.b16 %v881, %v880
  %v896 = vpack.c.b16 %v883, %v882
  %v897 = vpack.c.b16 %v885, %v884
  %v898 = vpack.c.b16 %v887, %v886
  %v899 = vpack.c.b16 %v889, %v888
  %v900 = vpack.c.b16 %v891, %v890
  %v901 = vpack.c.b16 %v893, %v892
  %910 = vmatprep.subr.bf16.mxu0 0
  %911 = vmatpush1.bf16.msra.mxu0 %v894
  %912 = vmatprep.subr.bf16.mxu0 0
  %913 = vmatpush1.bf16.msra.mxu0 %v895
  %914 = vmatprep.subr.bf16.mxu0 0
  %915 = vmatpush1.bf16.msra.mxu0 %v896
  %916 = vmatprep.subr.bf16.mxu0 0
  %917 = vmatpush1.bf16.msra.mxu0 %v897
  %918 = vmatprep.subr.bf16.mxu0 0
  %919 = vmatpush1.bf16.msra.mxu0 %v898
  %920 = vmatprep.subr.bf16.mxu0 0
  %921 = vmatpush1.bf16.msra.mxu0 %v899
  %922 = vmatprep.subr.bf16.mxu0 0
  %923 = vmatpush1.bf16.msra.mxu0 %v900
  %924 = vmatprep.subr.bf16.mxu0 0
  %925 = vmatpush1.bf16.msra.mxu0 %v901
  %926 = vmatprep.subr.bf16.mxu0 0
  %927 = vmatpush1.bf16.msra.mxu0 0
  %928 = vmatprep.subr.bf16.mxu0 0
  %929 = vmatpush1.bf16.msra.mxu0 0
  %930 = vmatprep.subr.bf16.mxu0 0
  %931 = vmatpush1.bf16.msra.mxu0 0
  %932 = vmatprep.subr.bf16.mxu0 0
  %933 = vmatpush1.bf16.msra.mxu0 0
  %934 = vmatprep.subr.bf16.mxu0 0
  %935 = vmatpush1.bf16.msra.mxu0 0
  %936 = vmatprep.subr.bf16.mxu0 0
  %937 = vmatpush1.bf16.msra.mxu0 0
  %938 = vmatprep.subr.bf16.mxu0 0
  %939 = vmatpush1.bf16.msra.mxu0 0
  %940 = vmatprep.subr.bf16.mxu0 0
  %941 = vmatpush1.bf16.msra.mxu0 0
  %942 = vmatprep.mubr.bf16.mxu0 0
  %943 = vmatmul.mubr.bf16.gmra.mrb[0].mxu0 %v839
  %v944 = vpop.f32.mrb[0].mxu0
  %v945 = vadd.f32 %v861, %v944
  %v946 = vpop.f32.mrb[0].mxu0
  %v947 = vpop.f32.mrb[0].mxu0
  %v948 = vadd.f32 %v861, %v947
  %v949 = vpop.f32.mrb[0].mxu0
  %950 = vdwg.mxu0
  %v951 = vmax.f32 %v945, 0.0
  %v952 = vmax.f32 %v948, 0.0
  %v953 = vpack.c.bf16 %v952, %v951
  %s954 = scalar_lea.vmem %s2, 192
  %v955 = vld [vmem:[%s954] sm:$0xf]
  %v956 = vld [vmem:[%s954 + $0x4] sm:$0xf]
  %v957 = vld [vmem:[%s954 + $0x8] sm:$0xf]
  %v958 = vld [vmem:[%s954 + $0xc] sm:$0xf]
  %v959 = vld [vmem:[%s954 + $0x10] sm:$0xf]
  %v960 = vld [vmem:[%s954 + $0x14] sm:$0xf]
  %v961 = vld [vmem:[%s954 + $0x18] sm:$0xf]
  %v962 = vld [vmem:[%s954 + $0x1c] sm:$0xf]
  %v963 = vld [vmem:[%s954 + $0x20] sm:$0xf]
  %v964 = vld [vmem:[%s954 + $0x24] sm:$0xf]
  %v965 = vld [vmem:[%s954 + $0x28] sm:$0xf]
  %v966 = vld [vmem:[%s954 + $0x2c] sm:$0xf]
  %v967 = vld [vmem:[%s954 + $0x30] sm:$0xf]
  %v968 = vld [vmem:[%s954 + $0x34] sm:$0xf]
  %v969 = vld [vmem:[%s954 + $0x38] sm:$0xf]
  %v970 = vld [vmem:[%s954 + $0x3c] sm:$0xf]
  %v971 = vld [vmem:[%s4 + $0x4] sm:$0x1]
  %v972 = vlaneseq
  %v973 = vshrl.u32 %v972, 7
  %v974 = vsub.s32 0, %v973
  %v975 = vrot.slane %v971, %v974
  %v992 = vunpack.c.l.b16 %v955
  %v993 = vunpack.c.l.b16 %v956
  %v994 = vunpack.c.l.b16 %v957
  %v995 = vunpack.c.l.b16 %v958
  %v996 = vunpack.c.l.b16 %v959
  %v997 = vunpack.c.l.b16 %v960
  %v998 = vunpack.c.l.b16 %v961
  %v999 = vunpack.c.l.b16 %v962
  %v1000 = vunpack.c.l.b16 %v963
  %v1001 = vunpack.c.l.b16 %v964
  %v1002 = vunpack.c.l.b16 %v965
  %v1003 = vunpack.c.l.b16 %v966
  %v1004 = vunpack.c.l.b16 %v967
  %v1005 = vunpack.c.l.b16 %v968
  %v1006 = vunpack.c.l.b16 %v969
  %v1007 = vunpack.c.l.b16 %v970
  %v1008 = vpack.c.b16 %v993, %v992
  %v1009 = vpack.c.b16 %v995, %v994
  %v1010 = vpack.c.b16 %v997, %v996
  %v1011 = vpack.c.b16 %v999, %v998
  %v1012 = vpack.c.b16 %v1001, %v1000
  %v1013 = vpack.c.b16 %v1003, %v1002
  %v1014 = vpack.c.b16 %v1005, %v1004
  %v1015 = vpack.c.b16 %v1007, %v1006
  %1024 = vmatprep.subr.bf16.mxu0 0
  %1025 = vmatpush1.bf16.msra.mxu0 %v1008
  %1026 = vmatprep.subr.bf16.mxu0 0
  %1027 = vmatpush1.bf16.msra.mxu0 %v1009
  %1028 = vmatprep.subr.bf16.mxu0 0
  %1029 = vmatpush1.bf16.msra.mxu0 %v1010
  %1030 = vmatprep.subr.bf16.mxu0 0
  %1031 = vmatpush1.bf16.msra.mxu0 %v1011
  %1032 = vmatprep.subr.bf16.mxu0 0
  %1033 = vmatpush1.bf16.msra.mxu0 %v1012
  %1034 = vmatprep.subr.bf16.mxu0 0
  %1035 = vmatpush1.bf16.msra.mxu0 %v1013
  %1036 = vmatprep.subr.bf16.mxu0 0
  %1037 = vmatpush1.bf16.msra.mxu0 %v1014
  %1038 = vmatprep.subr.bf16.mxu0 0
  %1039 = vmatpush1.bf16.msra.mxu0 %v1015
  %1040 = vmatprep.subr.bf16.mxu0 0
  %1041 = vmatpush1.bf16.msra.mxu0 0
  %1042 = vmatprep.subr.bf16.mxu0 0
  %1043 = vmatpush1.bf16.msra.mxu0 0
  %1044 = vmatprep.subr.bf16.mxu0 0
  %1045 = vmatpush1.bf16.msra.mxu0 0
  %1046 = vmatprep.subr.bf16.mxu0 0
  %1047 = vmatpush1.bf16.msra.mxu0 0
  %1048 = vmatprep.subr.bf16.mxu0 0
  %1049 = vmatpush1.bf16.msra.mxu0 0
  %1050 = vmatprep.subr.bf16.mxu0 0
  %1051 = vmatpush1.bf16.msra.mxu0 0
  %1052 = vmatprep.subr.bf16.mxu0 0
  %1053 = vmatpush1.bf16.msra.mxu0 0
  %1054 = vmatprep.subr.bf16.mxu0 0
  %1055 = vmatpush1.bf16.msra.mxu0 0
  %1056 = vmatprep.mubr.bf16.mxu0 0
  %1057 = vmatmul.mubr.bf16.gmra.mrb[0].mxu0 %v953
  %v1058 = vpop.f32.mrb[0].mxu0
  %v1059 = vadd.f32 %v975, %v1058
  %v1060 = vpop.f32.mrb[0].mxu0
  %v1061 = vpop.f32.mrb[0].mxu0
  %v1062 = vadd.f32 %v975, %v1061
  %v1063 = vpop.f32.mrb[0].mxu0
  %1064 = vdwg.mxu0
  %v1065 = vmax.f32 %v1059, 0.0
  %v1066 = vmax.f32 %v1062, 0.0
  %v1067 = vpack.c.bf16 %v1066, %v1065
  %s1068 = scalar_lea.vmem %s2, 256
  %v1069 = vld [vmem:[%s1068] sm:$0xf]
  %v1070 = vld [vmem:[%s1068 + $0x4] sm:$0xf]
  %v1071 = vld [vmem:[%s1068 + $0x8] sm:$0xf]
  %v1072 = vld [vmem:[%s1068 + $0xc] sm:$0xf]
  %v1073 = vld [vmem:[%s1068 + $0x10] sm:$0xf]
  %v1074 = vld [vmem:[%s1068 + $0x14] sm:$0xf]
  %v1075 = vld [vmem:[%s1068 + $0x18] sm:$0xf]
  %v1076 = vld [vmem:[%s1068 + $0x1c] sm:$0xf]
  %v1077 = vld [vmem:[%s1068 + $0x20] sm:$0xf]
  %v1078 = vld [vmem:[%s1068 + $0x24] sm:$0xf]
  %v1079 = vld [vmem:[%s1068 + $0x28] sm:$0xf]
  %v1080 = vld [vmem:[%s1068 + $0x2c] sm:$0xf]
  %v1081 = vld [vmem:[%s1068 + $0x30] sm:$0xf]
  %v1082 = vld [vmem:[%s1068 + $0x34] sm:$0xf]
  %v1083 = vld [vmem:[%s1068 + $0x38] sm:$0xf]
  %v1084 = vld [vmem:[%s1068 + $0x3c] sm:$0xf]
  %v1085 = vld [vmem:[%s4 + $0x5] sm:$0x1]
  %v1086 = vlaneseq
  %v1087 = vshrl.u32 %v1086, 7
  %v1088 = vsub.s32 0, %v1087
  %v1089 = vrot.slane %v1085, %v1088
  %v1106 = vunpack.c.l.b16 %v1069
  %v1107 = vunpack.c.l.b16 %v1070
  %v1108 = vunpack.c.l.b16 %v1071
  %v1109 = vunpack.c.l.b16 %v1072
  %v1110 = vunpack.c.l.b16 %v1073
  %v1111 = vunpack.c.l.b16 %v1074
  %v1112 = vunpack.c.l.b16 %v1075
  %v1113 = vunpack.c.l.b16 %v1076
  %v1114 = vunpack.c.l.b16 %v1077
  %v1115 = vunpack.c.l.b16 %v1078
  %v1116 = vunpack.c.l.b16 %v1079
  %v1117 = vunpack.c.l.b16 %v1080
  %v1118 = vunpack.c.l.b16 %v1081
  %v1119 = vunpack.c.l.b16 %v1082
  %v1120 = vunpack.c.l.b16 %v1083
  %v1121 = vunpack.c.l.b16 %v1084
  %v1122 = vpack.c.b16 %v1107, %v1106
  %v1123 = vpack.c.b16 %v1109, %v1108
  %v1124 = vpack.c.b16 %v1111, %v1110
  %v1125 = vpack.c.b16 %v1113, %v1112
  %v1126 = vpack.c.b16 %v1115, %v1114
  %v1127 = vpack.c.b16 %v1117, %v1116
  %v1128 = vpack.c.b16 %v1119, %v1118
  %v1129 = vpack.c.b16 %v1121, %v1120
  %1138 = vmatprep.subr.bf16.mxu0 0
  %1139 = vmatpush1.bf16.msra.mxu0 %v1122
  %1140 = vmatprep.subr.bf16.mxu0 0
  %1141 = vmatpush1.bf16.msra.mxu0 %v1123
  %1142 = vmatprep.subr.bf16.mxu0 0
  %1143 = vmatpush1.bf16.msra.mxu0 %v1124
  %1144 = vmatprep.subr.bf16.mxu0 0
  %1145 = vmatpush1.bf16.msra.mxu0 %v1125
  %1146 = vmatprep.subr.bf16.mxu0 0
  %1147 = vmatpush1.bf16.msra.mxu0 %v1126
  %1148 = vmatprep.subr.bf16.mxu0 0
  %1149 = vmatpush1.bf16.msra.mxu0 %v1127
  %1150 = vmatprep.subr.bf16.mxu0 0
  %1151 = vmatpush1.bf16.msra.mxu0 %v1128
  %1152 = vmatprep.subr.bf16.mxu0 0
  %1153 = vmatpush1.bf16.msra.mxu0 %v1129
  %1154 = vmatprep.subr.bf16.mxu0 0
  %1155 = vmatpush1.bf16.msra.mxu0 0
  %1156 = vmatprep.subr.bf16.mxu0 0
  %1157 = vmatpush1.bf16.msra.mxu0 0
  %1158 = vmatprep.subr.bf16.mxu0 0
  %1159 = vmatpush1.bf16.msra.mxu0 0
  %1160 = vmatprep.subr.bf16.mxu0 0
  %1161 = vmatpush1.bf16.msra.mxu0 0
  %1162 = vmatprep.subr.bf16.mxu0 0
  %1163 = vmatpush1.bf16.msra.mxu0 0
  %1164 = vmatprep.subr.bf16.mxu0 0
  %1165 = vmatpush1.bf16.msra.mxu0 0
  %1166 = vmatprep.subr.bf16.mxu0 0
  %1167 = vmatpush1.bf16.msra.mxu0 0
  %1168 = vmatprep.subr.bf16.mxu0 0
  %1169 = vmatpush1.bf16.msra.mxu0 0
  %1170 = vmatprep.mubr.bf16.mxu0 0
  %1171 = vmatmul.mubr.bf16.gmra.mrb[0].mxu0 %v1067
  %v1172 = vpop.f32.mrb[0].mxu0
  %v1173 = vadd.f32 %v1089, %v1172
  %v1174 = vpop.f32.mrb[0].mxu0
  %v1175 = vpop.f32.mrb[0].mxu0
  %v1176 = vadd.f32 %v1089, %v1175
  %v1177 = vpop.f32.mrb[0].mxu0
  %1178 = vdwg.mxu0
  %v1179 = vmax.f32 %v1173, 0.0
  %v1180 = vmax.f32 %v1176, 0.0
  %v1181 = vpack.c.bf16 %v1180, %v1179
  %v1182 = vld [vmem:[%s3] sm:$0xff]
  %v1183 = vld [vmem:[%s3 + $0x8] sm:$0xff]
  %v1184 = vld [vmem:[%s3 + $0x10] sm:$0xff]
  %v1185 = vld [vmem:[%s3 + $0x18] sm:$0xf]
  %v1186 = vld [vmem:[%s3 + $0x1c] sm:$0xff]
  %v1187 = vld [vmem:[%s3 + $0x24] sm:$0xff]
  %v1188 = vld [vmem:[%s3 + $0x2c] sm:$0xff]
  %v1189 = vld [vmem:[%s3 + $0x34] sm:$0xf]
  %v1190 = vld [vmem:[%s3 + $0x38] sm:$0xff]
  %v1191 = vld [vmem:[%s3 + $0x40] sm:$0xff]
  %v1192 = vld [vmem:[%s3 + $0x48] sm:$0xff]
  %v1193 = vld [vmem:[%s3 + $0x50] sm:$0xf]
  %v1194 = vld [vmem:[%s3 + $0x54] sm:$0xff]
  %v1195 = vld [vmem:[%s3 + $0x5c] sm:$0xff]
  %v1196 = vld [vmem:[%s3 + $0x64] sm:$0xff]
  %v1197 = vld [vmem:[%s3 + $0x6c] sm:$0xf]
  %v1198 = vld [vmem:[%s3 + $0x70] sm:$0xff]
  %v1199 = vld [vmem:[%s3 + $0x78] sm:$0xff]
  %v1200 = vld [vmem:[%s3 + $0x80] sm:$0xff]
  %v1201 = vld [vmem:[%s3 + $0x88] sm:$0xf]
  %v1202 = vld [vmem:[%s3 + $0x8c] sm:$0xff]
  %v1203 = vld [vmem:[%s3 + $0x94] sm:$0xff]
  %v1204 = vld [vmem:[%s3 + $0x9c] sm:$0xff]
  %v1205 = vld [vmem:[%s3 + $0xa4] sm:$0xf]
  %v1206 = vld [vmem:[%s3 + $0xa8] sm:$0xff]
  %v1207 = vld [vmem:[%s3 + $0xb0] sm:$0xff]
  %v1208 = vld [vmem:[%s3 + $0xb8] sm:$0xff]
  %v1209 = vld [vmem:[%s3 + $0xc0] sm:$0xf]
  %v1210 = vld [vmem:[%s3 + $0xc4] sm:$0xff]
  %v1211 = vld [vmem:[%s3 + $0xcc] sm:$0xff]
  %v1212 = vld [vmem:[%s3 + $0xd4] sm:$0xff]
  %v1213 = vld [vmem:[%s3 + $0xdc] sm:$0xf]
  %v1214 = vld [vmem:[%s3 + $0xe0] sm:$0xff]
  %v1215 = vld [vmem:[%s3 + $0xe8] sm:$0xff]
  %v1216 = vld [vmem:[%s3 + $0xf0] sm:$0xff]
  %v1217 = vld [vmem:[%s3 + $0xf8] sm:$0xf]
  %v1218 = vld [vmem:[%s3 + $0xfc] sm:$0xff]
  %v1219 = vld [vmem:[%s3 + $0x104] sm:$0xff]
  %v1220 = vld [vmem:[%s3 + $0x10c] sm:$0xff]
  %v1221 = vld [vmem:[%s3 + $0x114] sm:$0xf]
  %v1222 = vld [vmem:[%s3 + $0x118] sm:$0xff]
  %v1223 = vld [vmem:[%s3 + $0x120] sm:$0xff]
  %v1224 = vld [vmem:[%s3 + $0x128] sm:$0xff]
  %v1225 = vld [vmem:[%s3 + $0x130] sm:$0xf]
  %v1226 = vld [vmem:[%s3 + $0x134] sm:$0xff]
  %v1227 = vld [vmem:[%s3 + $0x13c] sm:$0xff]
  %v1228 = vld [vmem:[%s3 + $0x144] sm:$0xff]
  %v1229 = vld [vmem:[%s3 + $0x14c] sm:$0xf]
  %v1230 = vld [vmem:[%s3 + $0x150] sm:$0xff]
  %v1231 = vld [vmem:[%s3 + $0x158] sm:$0xff]
  %v1232 = vld [vmem:[%s3 + $0x160] sm:$0xff]
  %v1233 = vld [vmem:[%s3 + $0x168] sm:$0xf]
  %v1234 = vld [vmem:[%s3 + $0x16c] sm:$0xff]
  %v1235 = vld [vmem:[%s3 + $0x174] sm:$0xff]
  %v1236 = vld [vmem:[%s3 + $0x17c] sm:$0xff]
  %v1237 = vld [vmem:[%s3 + $0x184] sm:$0xf]
  %v1238 = vld [vmem:[%s3 + $0x188] sm:$0xff]
  %v1239 = vld [vmem:[%s3 + $0x190] sm:$0xff]
  %v1240 = vld [vmem:[%s3 + $0x198] sm:$0xff]
  %v1241 = vld [vmem:[%s3 + $0x1a0] sm:$0xf]
  %v1242 = vld [vmem:[%s3 + $0x1a4] sm:$0xff]
  %v1243 = vld [vmem:[%s3 + $0x1ac] sm:$0xff]
  %v1244 = vld [vmem:[%s3 + $0x1b4] sm:$0xff]
  %v1245 = vld [vmem:[%s3 + $0x1bc] sm:$0xf]
  %v1246 = vld [vmem:[%s5] sm:$0x7f]
  %v1248 = vlaneseq
  %v1249 = vshrl.u32 %v1248, 7
  %v1250 = vsub.s32 0, %v1249
  %v1251 = vrot.slane %v1246, %v1250
  %v1252 = vlaneseq
  %v1253 = vshrl.u32 %v1252, 7
  %v1254 = vsub.s32 1, %v1253
  %v1255 = vrot.slane %v1246, %v1254
  %v1256 = vlaneseq
  %v1257 = vshrl.u32 %v1256, 7
  %v1258 = vsub.s32 2, %v1257
  %v1259 = vrot.slane %v1246, %v1258
  %v1260 = vlaneseq
  %v1261 = vshrl.u32 %v1260, 7
  %v1262 = vsub.s32 3, %v1261
  %v1263 = vrot.slane %v1246, %v1262
  %v1264 = vlaneseq
  %v1265 = vshrl.u32 %v1264, 7
  %v1266 = vsub.s32 4, %v1265
  %v1267 = vrot.slane %v1246, %v1266
  %v1268 = vlaneseq
  %v1269 = vshrl.u32 %v1268, 7
  %v1270 = vsub.s32 5, %v1269
  %v1271 = vrot.slane %v1246, %v1270
  %v1272 = vlaneseq
  %v1273 = vshrl.u32 %v1272, 7
  %v1274 = vsub.s32 6, %v1273
  %v1275 = vrot.slane %v1246, %v1274
  %v1347 = vunpack.c.l.b16 %v1182
  %v1348 = vunpack.c.h.b16 %v1182
  %v1349 = vunpack.c.l.b16 %v1183
  %v1350 = vunpack.c.h.b16 %v1183
  %v1351 = vunpack.c.l.b16 %v1184
  %v1352 = vunpack.c.h.b16 %v1184
  %v1353 = vunpack.c.l.b16 %v1185
  %v1354 = vunpack.c.l.b16 %v1186
  %v1355 = vunpack.c.h.b16 %v1186
  %v1356 = vunpack.c.l.b16 %v1187
  %v1357 = vunpack.c.h.b16 %v1187
  %v1358 = vunpack.c.l.b16 %v1188
  %v1359 = vunpack.c.h.b16 %v1188
  %v1360 = vunpack.c.l.b16 %v1189
  %v1361 = vunpack.c.l.b16 %v1190
  %v1362 = vunpack.c.h.b16 %v1190
  %v1363 = vunpack.c.l.b16 %v1191
  %v1364 = vunpack.c.h.b16 %v1191
  %v1365 = vunpack.c.l.b16 %v1192
  %v1366 = vunpack.c.h.b16 %v1192
  %v1367 = vunpack.c.l.b16 %v1193
  %v1368 = vunpack.c.l.b16 %v1194
  %v1369 = vunpack.c.h.b16 %v1194
  %v1370 = vunpack.c.l.b16 %v1195
  %v1371 = vunpack.c.h.b16 %v1195
  %v1372 = vunpack.c.l.b16 %v1196
  %v1373 = vunpack.c.h.b16 %v1196
  %v1374 = vunpack.c.l.b16 %v1197
  %v1375 = vunpack.c.l.b16 %v1198
  %v1376 = vunpack.c.h.b16 %v1198
  %v1377 = vunpack.c.l.b16 %v1199
  %v1378 = vunpack.c.h.b16 %v1199
  %v1379 = vunpack.c.l.b16 %v1200
  %v1380 = vunpack.c.h.b16 %v1200
  %v1381 = vunpack.c.l.b16 %v1201
  %v1382 = vunpack.c.l.b16 %v1202
  %v1383 = vunpack.c.h.b16 %v1202
  %v1384 = vunpack.c.l.b16 %v1203
  %v1385 = vunpack.c.h.b16 %v1203
  %v1386 = vunpack.c.l.b16 %v1204
  %v1387 = vunpack.c.h.b16 %v1204
  %v1388 = vunpack.c.l.b16 %v1205
  %v1389 = vunpack.c.l.b16 %v1206
  %v1390 = vunpack.c.h.b16 %v1206
  %v1391 = vunpack.c.l.b16 %v1207
  %v1392 = vunpack.c.h.b16 %v1207
  %v1393 = vunpack.c.l.b16 %v1208
  %v1394 = vunpack.c.h.b16 %v1208
  %v1395 = vunpack.c.l.b16 %v1209
  %v1396 = vunpack.c.l.b16 %v1210
  %v1397 = vunpack.c.h.b16 %v1210
  %v1398 = vunpack.c.l.b16 %v1211
  %v1399 = vunpack.c.h.b16 %v1211
  %v1400 = vunpack.c.l.b16 %v1212
  %v1401 = vunpack.c.h.b16 %v1212
  %v1402 = vunpack.c.l.b16 %v1213
  %v1403 = vunpack.c.l.b16 %v1214
  %v1404 = vunpack.c.h.b16 %v1214
  %v1405 = vunpack.c.l.b16 %v1215
  %v1406 = vunpack.c.h.b16 %v1215
  %v1407 = vunpack.c.l.b16 %v1216
  %v1408 = vunpack.c.h.b16 %v1216
  %v1409 = vunpack.c.l.b16 %v1217
  %v1410 = vunpack.c.l.b16 %v1218
  %v1411 = vunpack.c.h.b16 %v1218
  %v1412 = vunpack.c.l.b16 %v1219
  %v1413 = vunpack.c.h.b16 %v1219
  %v1414 = vunpack.c.l.b16 %v1220
  %v1415 = vunpack.c.h.b16 %v1220
  %v1416 = vunpack.c.l.b16 %v1221
  %v1417 = vunpack.c.l.b16 %v1222
  %v1418 = vunpack.c.h.b16 %v1222
  %v1419 = vunpack.c.l.b16 %v1223
  %v1420 = vunpack.c.h.b16 %v1223
  %v1421 = vunpack.c.l.b16 %v1224
  %v1422 = vunpack.c.h.b16 %v1224
  %v1423 = vunpack.c.l.b16 %v1225
  %v1424 = vunpack.c.l.b16 %v1226
  %v1425 = vunpack.c.h.b16 %v1226
  %v1426 = vunpack.c.l.b16 %v1227
  %v1427 = vunpack.c.h.b16 %v1227
  %v1428 = vunpack.c.l.b16 %v1228
  %v1429 = vunpack.c.h.b16 %v1228
  %v1430 = vunpack.c.l.b16 %v1229
  %v1431 = vunpack.c.l.b16 %v1230
  %v1432 = vunpack.c.h.b16 %v1230
  %v1433 = vunpack.c.l.b16 %v1231
  %v1434 = vunpack.c.h.b16 %v1231
  %v1435 = vunpack.c.l.b16 %v1232
  %v1436 = vunpack.c.h.b16 %v1232
  %v1437 = vunpack.c.l.b16 %v1233
  %v1438 = vunpack.c.l.b16 %v1234
  %v1439 = vunpack.c.h.b16 %v1234
  %v1440 = vunpack.c.l.b16 %v1235
  %v1441 = vunpack.c.h.b16 %v1235
  %v1442 = vunpack.c.l.b16 %v1236
  %v1443 = vunpack.c.h.b16 %v1236
  %v1444 = vunpack.c.l.b16 %v1237
  %v1445 = vunpack.c.l.b16 %v1238
  %v1446 = vunpack.c.h.b16 %v1238
  %v1447 = vunpack.c.l.b16 %v1239
  %v1448 = vunpack.c.h.b16 %v1239
  %v1449 = vunpack.c.l.b16 %v1240
  %v1450 = vunpack.c.h.b16 %v1240
  %v1451 = vunpack.c.l.b16 %v1241
  %v1452 = vunpack.c.l.b16 %v1242
  %v1453 = vunpack.c.h.b16 %v1242
  %v1454 = vunpack.c.l.b16 %v1243
  %v1455 = vunpack.c.h.b16 %v1243
  %v1456 = vunpack.c.l.b16 %v1244
  %v1457 = vunpack.c.h.b16 %v1244
  %v1458 = vunpack.c.l.b16 %v1245
  %v1459 = vpack.c.b16 %v1354, %v1347
  %v1460 = vpack.c.b16 %v1355, %v1348
  %v1461 = vpack.c.b16 %v1356, %v1349
  %v1462 = vpack.c.b16 %v1357, %v1350
  %v1463 = vpack.c.b16 %v1358, %v1351
  %v1464 = vpack.c.b16 %v1359, %v1352
  %v1465 = vpack.c.b16 %v1360, %v1353
  %v1466 = vpack.c.b16 %v1368, %v1361
  %v1467 = vpack.c.b16 %v1369, %v1362
  %v1468 = vpack.c.b16 %v1370, %v1363
  %v1469 = vpack.c.b16 %v1371, %v1364
  %v1470 = vpack.c.b16 %v1372, %v1365
  %v1471 = vpack.c.b16 %v1373, %v1366
  %v1472 = vpack.c.b16 %v1374, %v1367
  %v1473 = vpack.c.b16 %v1382, %v1375
  %v1474 = vpack.c.b16 %v1383, %v1376
  %v1475 = vpack.c.b16 %v1384, %v1377
  %v1476 = vpack.c.b16 %v1385, %v1378
  %v1477 = vpack.c.b16 %v1386, %v1379
  %v1478 = vpack.c.b16 %v1387, %v1380
  %v1479 = vpack.c.b16 %v1388, %v1381
  %v1480 = vpack.c.b16 %v1396, %v1389
  %v1481 = vpack.c.b16 %v1397, %v1390
  %v1482 = vpack.c.b16 %v1398, %v1391
  %v1483 = vpack.c.b16 %v1399, %v1392
  %v1484 = vpack.c.b16 %v1400, %v1393
  %v1485 = vpack.c.b16 %v1401, %v1394
  %v1486 = vpack.c.b16 %v1402, %v1395
  %v1487 = vpack.c.b16 %v1410, %v1403
  %v1488 = vpack.c.b16 %v1411, %v1404
  %v1489 = vpack.c.b16 %v1412, %v1405
  %v1490 = vpack.c.b16 %v1413, %v1406
  %v1491 = vpack.c.b16 %v1414, %v1407
  %v1492 = vpack.c.b16 %v1415, %v1408
  %v1493 = vpack.c.b16 %v1416, %v1409
  %v1494 = vpack.c.b16 %v1424, %v1417
  %v1495 = vpack.c.b16 %v1425, %v1418
  %v1496 = vpack.c.b16 %v1426, %v1419
  %v1497 = vpack.c.b16 %v1427, %v1420
  %v1498 = vpack.c.b16 %v1428, %v1421
  %v1499 = vpack.c.b16 %v1429, %v1422
  %v1500 = vpack.c.b16 %v1430, %v1423
  %v1501 = vpack.c.b16 %v1438, %v1431
  %v1502 = vpack.c.b16 %v1439, %v1432
  %v1503 = vpack.c.b16 %v1440, %v1433
  %v1504 = vpack.c.b16 %v1441, %v1434
  %v1505 = vpack.c.b16 %v1442, %v1435
  %v1506 = vpack.c.b16 %v1443, %v1436
  %v1507 = vpack.c.b16 %v1444, %v1437
  %v1508 = vpack.c.b16 %v1452, %v1445
  %v1509 = vpack.c.b16 %v1453, %v1446
  %v1510 = vpack.c.b16 %v1454, %v1447
  %v1511 = vpack.c.b16 %v1455, %v1448
  %v1512 = vpack.c.b16 %v1456, %v1449
  %v1513 = vpack.c.b16 %v1457, %v1450
  %v1514 = vpack.c.b16 %v1458, %v1451
  %1571 = vmatprep.subr.bf16.mxu0 %v1460
  %1572 = vmatpush1.bf16.msra.mxu0 %v1459
  %1573 = vmatprep.subr.bf16.mxu0 %v1467
  %1574 = vmatpush1.bf16.msra.mxu0 %v1466
  %1575 = vmatprep.subr.bf16.mxu0 %v1474
  %1576 = vmatpush1.bf16.msra.mxu0 %v1473
  %1577 = vmatprep.subr.bf16.mxu0 %v1481
  %1578 = vmatpush1.bf16.msra.mxu0 %v1480
  %1579 = vmatprep.subr.bf16.mxu0 %v1488
  %1580 = vmatpush1.bf16.msra.mxu0 %v1487
  %1581 = vmatprep.subr.bf16.mxu0 %v1495
  %1582 = vmatpush1.bf16.msra.mxu0 %v1494
  %1583 = vmatprep.subr.bf16.mxu0 %v1502
  %1584 = vmatpush1.bf16.msra.mxu0 %v1501
  %1585 = vmatprep.subr.bf16.mxu0 %v1509
  %1586 = vmatpush1.bf16.msra.mxu0 %v1508
  %1587 = vmatprep.subr.bf16.mxu0 0
  %1588 = vmatpush1.bf16.msra.mxu0 0
  %1589 = vmatprep.subr.bf16.mxu0 0
  %1590 = vmatpush1.bf16.msra.mxu0 0
  %1591 = vmatprep.subr.bf16.mxu0 0
  %1592 = vmatpush1.bf16.msra.mxu0 0
  %1593 = vmatprep.subr.bf16.mxu0 0
  %1594 = vmatpush1.bf16.msra.mxu0 0
  %1595 = vmatprep.subr.bf16.mxu0 0
  %1596 = vmatpush1.bf16.msra.mxu0 0
  %1597 = vmatprep.subr.bf16.mxu0 0
  %1598 = vmatpush1.bf16.msra.mxu0 0
  %1599 = vmatprep.subr.bf16.mxu0 0
  %1600 = vmatpush1.bf16.msra.mxu0 0
  %1601 = vmatprep.subr.bf16.mxu0 0
  %1602 = vmatpush1.bf16.msra.mxu0 0
  %1603 = vmatprep.mubr.bf16.mxu0 0
  %1604 = vmatmul.mubr.bf16.gmra.mrb[0].mxu0 %v1181
  %v1605 = vpop.f32.mrb[0].mxu0
  %v1606 = vadd.f32 %v1251, %v1605
  %v1607 = vpop.f32.mrb[0].mxu0
  %v1608 = vadd.f32 %v1255, %v1607
  %v1609 = vpop.f32.mrb[0].mxu0
  %v1610 = vadd.f32 %v1251, %v1609
  %v1611 = vpop.f32.mrb[0].mxu0
  %v1612 = vadd.f32 %v1255, %v1611
  %1613 = vdwg.mxu0
  %1614 = vmatprep.subr.bf16.mxu0 %v1462
  %1615 = vmatpush1.bf16.msra.mxu0 %v1461
  %1616 = vmatprep.subr.bf16.mxu0 %v1469
  %1617 = vmatpush1.bf16.msra.mxu0 %v1468
  %1618 = vmatprep.subr.bf16.mxu0 %v1476
  %1619 = vmatpush1.bf16.msra.mxu0 %v1475
  %1620 = vmatprep.subr.bf16.mxu0 %v1483
  %1621 = vmatpush1.bf16.msra.mxu0 %v1482
  %1622 = vmatprep.subr.bf16.mxu0 %v1490
  %1623 = vmatpush1.bf16.msra.mxu0 %v1489
  %1624 = vmatprep.subr.bf16.mxu0 %v1497
  %1625 = vmatpush1.bf16.msra.mxu0 %v1496
  %1626 = vmatprep.subr.bf16.mxu0 %v1504
  %1627 = vmatpush1.bf16.msra.mxu0 %v1503
  %1628 = vmatprep.subr.bf16.mxu0 %v1511
  %1629 = vmatpush1.bf16.msra.mxu0 %v1510
  %1630 = vmatprep.subr.bf16.mxu0 0
  %1631 = vmatpush1.bf16.msra.mxu0 0
  %1632 = vmatprep.subr.bf16.mxu0 0
  %1633 = vmatpush1.bf16.msra.mxu0 0
  %1634 = vmatprep.subr.bf16.mxu0 0
  %1635 = vmatpush1.bf16.msra.mxu0 0
  %1636 = vmatprep.subr.bf16.mxu0 0
  %1637 = vmatpush1.bf16.msra.mxu0 0
  %1638 = vmatprep.subr.bf16.mxu0 0
  %1639 = vmatpush1.bf16.msra.mxu0 0
  %1640 = vmatprep.subr.bf16.mxu0 0
  %1641 = vmatpush1.bf16.msra.mxu0 0
  %1642 = vmatprep.subr.bf16.mxu0 0
  %1643 = vmatpush1.bf16.msra.mxu0 0
  %1644 = vmatprep.subr.bf16.mxu0 0
  %1645 = vmatpush1.bf16.msra.mxu0 0
  %1646 = vmatprep.mubr.bf16.mxu0 0
  %1647 = vmatmul.mubr.bf16.gmra.mrb[0].mxu0 %v1181
  %v1648 = vpop.f32.mrb[0].mxu0
  %v1649 = vadd.f32 %v1259, %v1648
  %v1650 = vpop.f32.mrb[0].mxu0
  %v1651 = vadd.f32 %v1263, %v1650
  %v1652 = vpop.f32.mrb[0].mxu0
  %v1653 = vadd.f32 %v1259, %v1652
  %v1654 = vpop.f32.mrb[0].mxu0
  %v1655 = vadd.f32 %v1263, %v1654
  %1656 = vdwg.mxu0
  %1657 = vmatprep.subr.bf16.mxu0 %v1464
  %1658 = vmatpush1.bf16.msra.mxu0 %v1463
  %1659 = vmatprep.subr.bf16.mxu0 %v1471
  %1660 = vmatpush1.bf16.msra.mxu0 %v1470
  %1661 = vmatprep.subr.bf16.mxu0 %v1478
  %1662 = vmatpush1.bf16.msra.mxu0 %v1477
  %1663 = vmatprep.subr.bf16.mxu0 %v1485
  %1664 = vmatpush1.bf16.msra.mxu0 %v1484
  %1665 = vmatprep.subr.bf16.mxu0 %v1492
  %1666 = vmatpush1.bf16.msra.mxu0 %v1491
  %1667 = vmatprep.subr.bf16.mxu0 %v1499
  %1668 = vmatpush1.bf16.msra.mxu0 %v1498
  %1669 = vmatprep.subr.bf16.mxu0 %v1506
  %1670 = vmatpush1.bf16.msra.mxu0 %v1505
  %1671 = vmatprep.subr.bf16.mxu0 %v1513
  %1672 = vmatpush1.bf16.msra.mxu0 %v1512
  %1673 = vmatprep.subr.bf16.mxu0 0
  %1674 = vmatpush1.bf16.msra.mxu0 0
  %1675 = vmatprep.subr.bf16.mxu0 0
  %1676 = vmatpush1.bf16.msra.mxu0 0
  %1677 = vmatprep.subr.bf16.mxu0 0
  %1678 = vmatpush1.bf16.msra.mxu0 0
  %1679 = vmatprep.subr.bf16.mxu0 0
  %1680 = vmatpush1.bf16.msra.mxu0 0
  %1681 = vmatprep.subr.bf16.mxu0 0
  %1682 = vmatpush1.bf16.msra.mxu0 0
  %1683 = vmatprep.subr.bf16.mxu0 0
  %1684 = vmatpush1.bf16.msra.mxu0 0
  %1685 = vmatprep.subr.bf16.mxu0 0
  %1686 = vmatpush1.bf16.msra.mxu0 0
  %1687 = vmatprep.subr.bf16.mxu0 0
  %1688 = vmatpush1.bf16.msra.mxu0 0
  %1689 = vmatprep.mubr.bf16.mxu0 0
  %1690 = vmatmul.mubr.bf16.gmra.mrb[0].mxu0 %v1181
  %v1691 = vpop.f32.mrb[0].mxu0
  %v1692 = vadd.f32 %v1267, %v1691
  %v1693 = vpop.f32.mrb[0].mxu0
  %v1694 = vadd.f32 %v1271, %v1693
  %v1695 = vpop.f32.mrb[0].mxu0
  %v1696 = vadd.f32 %v1267, %v1695
  %v1697 = vpop.f32.mrb[0].mxu0
  %v1698 = vadd.f32 %v1271, %v1697
  %1699 = vdwg.mxu0
  %1700 = vmatprep.subr.bf16.mxu0 0
  %1701 = vmatpush1.bf16.msra.mxu0 %v1465
  %1702 = vmatprep.subr.bf16.mxu0 0
  %1703 = vmatpush1.bf16.msra.mxu0 %v1472
  %1704 = vmatprep.subr.bf16.mxu0 0
  %1705 = vmatpush1.bf16.msra.mxu0 %v1479
  %1706 = vmatprep.subr.bf16.mxu0 0
  %1707 = vmatpush1.bf16.msra.mxu0 %v1486
  %1708 = vmatprep.subr.bf16.mxu0 0
  %1709 = vmatpush1.bf16.msra.mxu0 %v1493
  %1710 = vmatprep.subr.bf16.mxu0 0
  %1711 = vmatpush1.bf16.msra.mxu0 %v1500
  %1712 = vmatprep.subr.bf16.mxu0 0
  %1713 = vmatpush1.bf16.msra.mxu0 %v1507
  %1714 = vmatprep.subr.bf16.mxu0 0
  %1715 = vmatpush1.bf16.msra.mxu0 %v1514
  %1716 = vmatprep.subr.bf16.mxu0 0
  %1717 = vmatpush1.bf16.msra.mxu0 0
  %1718 = vmatprep.subr.bf16.mxu0 0
  %1719 = vmatpush1.bf16.msra.mxu0 0
  %1720 = vmatprep.subr.bf16.mxu0 0
  %1721 = vmatpush1.bf16.msra.mxu0 0
  %1722 = vmatprep.subr.bf16.mxu0 0
  %1723 = vmatpush1.bf16.msra.mxu0 0
  %1724 = vmatprep.subr.bf16.mxu0 0
  %1725 = vmatpush1.bf16.msra.mxu0 0
  %1726 = vmatprep.subr.bf16.mxu0 0
  %1727 = vmatpush1.bf16.msra.mxu0 0
  %1728 = vmatprep.subr.bf16.mxu0 0
  %1729 = vmatpush1.bf16.msra.mxu0 0
  %1730 = vmatprep.subr.bf16.mxu0 0
  %1731 = vmatpush1.bf16.msra.mxu0 0
  %1732 = vmatprep.mubr.bf16.mxu0 0
  %1733 = vmatmul.mubr.bf16.gmra.mrb[0].mxu0 %v1181
  %v1734 = vpop.f32.mrb[0].mxu0
  %v1735 = vadd.f32 %v1275, %v1734
  %v1736 = vpop.f32.mrb[0].mxu0
  %v1737 = vpop.f32.mrb[0].mxu0
  %v1738 = vadd.f32 %v1275, %v1737
  %v1739 = vpop.f32.mrb[0].mxu0
  %1740 = vdwg.mxu0
  %v1741 = vtanh.pop %v1606
  %v1742 = vtanh.pop %v1608
  %v1743 = vtanh.pop %v1649
  %v1744 = vtanh.pop %v1651
  %v1745 = vtanh.pop %v1692
  %v1746 = vtanh.pop %v1694
  %v1747 = vtanh.pop %v1735
  %v1748 = vtanh.pop %v1610
  %v1749 = vtanh.pop %v1612
  %v1750 = vtanh.pop %v1653
  %v1751 = vtanh.pop %v1655
  %v1752 = vtanh.pop %v1696
  %v1753 = vtanh.pop %v1698
  %v1754 = vtanh.pop %v1738
  %1755 = vst [vmem:[%s6] sm:$0xff] %v1741
  %1756 = vst [vmem:[%s6 + $0x8] sm:$0xff] %v1742
  %1757 = vst [vmem:[%s6 + $0x10] sm:$0xff] %v1743
  %1758 = vst [vmem:[%s6 + $0x18] sm:$0xff] %v1744
  %1759 = vst [vmem:[%s6 + $0x20] sm:$0xff] %v1745
  %1760 = vst [vmem:[%s6 + $0x28] sm:$0xff] %v1746
  %1761 = vst.msk [vmem:[%s6 + $0x30] sm:$0xff] %vm442, %v1747
  %1762 = vst [vmem:[%s6 + $0x38] sm:$0xff] %v1748
  %1763 = vst [vmem:[%s6 + $0x40] sm:$0xff] %v1749
  %1764 = vst [vmem:[%s6 + $0x48] sm:$0xff] %v1750
  %1765 = vst [vmem:[%s6 + $0x50] sm:$0xff] %v1751
  %1766 = vst [vmem:[%s6 + $0x58] sm:$0xff] %v1752
  %1767 = vst [vmem:[%s6 + $0x60] sm:$0xff] %v1753
  %1768 = vst.msk [vmem:[%s6 + $0x68] sm:$0xff] %vm442, %v1754
  // Predicated region
  $region26: #{autoencoder_forward_packed.1} parent=0 // pred_check
    _
  $region27: #{autoencoder_forward_packed.1} parent=0 // pred_check_branch
    %1770 = sbr.rel (0) target = $region29
  $region28: #{autoencoder_forward_packed.1} parent=0 // pred_region
    _
  $region29: #{autoencoder_forward_packed.1} parent=0 // pred_fallthru
    _
  // Predicated region
  $region30: #{autoencoder_forward_packed.1} parent=0 // pred_check
    _
  $region31: #{autoencoder_forward_packed.1} parent=0 // pred_check_branch
    %1772 = sbr.rel (0) target = $region33
  $region32: #{autoencoder_forward_packed.1} parent=0 // pred_region
    _
  $region33: #{autoencoder_forward_packed.1} parent=0 // pred_fallthru
    _

</llo_original>
